<compile_context>
chip_gen: v5e
topology: v5e:2x2
jax: 0.10.0
libtpu: 0.0.40
codegen_flags: <defaults>
</compile_context>

<pallas_src>
import functools

import jax
import jax.numpy as jnp
from jax.experimental import pallas as pl
from jax.experimental.pallas import tpu as pltpu

# Activation per layer: g+tanh, encode1, encode2, encode3+sigmoid,
#                       decode1, decode2, decode3, h+sigmoid
_ACTS = ("tanh", None, None, "sigmoid", None, None, None, "sigmoid")


def _sigmoid_via_tanh(z):
    """sigmoid(z) == 0.5 * (1 + tanh(0.5 * z)).

    Exact identity; one EUP transcendental per element instead of exp + divide.
    """
    return 0.5 * (jnp.tanh(0.5 * z) + 1.0)


def autoencoder_kernel(x_ref, w_ref, b_ref, out_ref):
    """x_ref: (TB, P) f32; w_ref: (L, P, P); b_ref: (L, 1, P); out_ref: (TB, P) f32."""
    h = x_ref[...]  # f32 activations throughout (portable across v5e/v6e/v7x)
    for l, act in enumerate(_ACTS):
        w = w_ref[l]                       # (P, P), resident in VMEM
        b = b_ref[l]                       # (1, P)
        z = jnp.dot(h.astype(w.dtype), w, preferred_element_type=jnp.float32)
        z = z + b.astype(jnp.float32)
        if act == "tanh":
            h = jnp.tanh(z)
        elif act == "sigmoid":
            h = _sigmoid_via_tanh(z)
        else:
            h = z
    out_ref[...] = h.astype(out_ref.dtype)


def pack_params(params, pad=128, weights_dtype=jnp.bfloat16):
    """Pack list of (W_t (in,out), b (1,out)) into zero-padded slabs.

    Returns (w_slab (L, pad, pad), b_slab (L, 1, pad)).

    INVARIANT: padded rows/cols/biases MUST be zero. The kernel relies on this so
    that pad lanes (which pass through sigmoid(0)=0.5 mid-network) contribute
    nothing to real outputs via the next layer's zero weight rows.
    """
    n = len(params)
    w_slab = jnp.zeros((n, pad, pad), weights_dtype)
    b_slab = jnp.zeros((n, 1, pad), weights_dtype)
    for l, (w_t, b) in enumerate(params):
        fi, fo = w_t.shape
        assert fi <= pad and fo <= pad, "layer dims must fit in the padded slab"
        w_slab = w_slab.at[l, :fi, :fo].set(w_t.astype(weights_dtype))
        b_slab = b_slab.at[l, 0, :fo].set(b.reshape(-1).astype(weights_dtype))
    return w_slab, b_slab


@functools.partial(jax.jit, static_argnames=("tb",))
def autoencoder_forward(x, w_slab, b_slab, *, tb=None):
    """x: (B, num_question) f32; w_slab: (L, P, P); b_slab: (L, 1, P)."""
    B, nq = x.shape
    n_layers, pad, _ = w_slab.shape

    if tb is None:
        # Minimum number of grid steps for small batches (single step at B<=1024),
        # capped so very large batches still get x/out tile pipelining.
        # On v7x, pass tb explicitly (~B/4) so both TensorCores get >=2 steps.
        tb = min(((B + 7) // 8) * 8, 1024)
    assert tb % 8 == 0, "batch tile must be sublane-aligned (multiple of 8)"

    # Pad features to the lane-dense slab width and batch to a multiple of TB.
    x_p = x
    if nq < pad:
        x_p = jnp.pad(x_p, ((0, 0), (0, pad - nq)))
    b_padded = ((B + tb - 1) // tb) * tb
    if b_padded != B:
        x_p = jnp.pad(x_p, ((0, b_padded - B), (0, 0)))

    grid = (b_padded // tb,)
    w_itemsize = jnp.dtype(w_slab.dtype).itemsize
    cost = pl.CostEstimate(
        flops=2 * b_padded * n_layers * pad * pad,
        # 3 activation layers (tanh, sigmoid x2), each 1 tanh/element in-kernel.
        transcendentals=3 * b_padded * pad,
        bytes_accessed=(w_slab.size + b_slab.size) * w_itemsize
        + 2 * b_padded * pad * 4,
    )

    # VMEM budget: double-buffered x + out tiles, plus (double-buffered) slabs.
    vmem_bytes = 4 * tb * pad * 4 + 2 * (w_slab.size + b_slab.size) * w_itemsize
    compiler_kwargs = dict(dimension_semantics=("parallel",))
    if vmem_bytes > 12 * (1 << 20):
        # Only needed for very large tb (v5e's default scoped VMEM is 16 MiB).
        compiler_kwargs["vmem_limit_bytes"] = int(min(2 * vmem_bytes, 64 << 20))

    out = pl.pallas_call(
        autoencoder_kernel,
        out_shape=jax.ShapeDtypeStruct((b_padded, pad), jnp.float32),
        grid=grid,
        in_specs=[
            # x: one (TB, P) tile per grid step -> double-buffered by the pipeline.
            pl.BlockSpec((tb, pad), lambda i: (i, 0)),
            # Weight / bias slabs: constant block index -> stay resident in VMEM
            # (fetched once per call, not per grid step).
            pl.BlockSpec((n_layers, pad, pad), lambda i: (0, 0, 0)),
            pl.BlockSpec((n_layers, 1, pad), lambda i: (0, 0, 0)),
        ],
        out_specs=pl.BlockSpec((tb, pad), lambda i: (i, 0)),
        compiler_params=pltpu.CompilerParams(**compiler_kwargs),
        cost_estimate=cost,
    )(x_p, w_slab, b_slab)

    return out[:B, :nq]


def init_params(key, layer_dims):
    """Deterministic init mimicking nn.Linear shapes.

    layer_dims: list of (in_features, out_features).
    Returns list of (W_transposed (in,out), bias (1,out)) f32 arrays.
    """
    params = []
    for i, (fan_in, fan_out) in enumerate(layer_dims):
        kw, kb = jax.random.split(jax.random.fold_in(key, i))
        bound = 1.0 / jnp.sqrt(jnp.float32(fan_in))
        # PyTorch Linear stores W as (out, in); we store it transposed as (in, out).
        w_t = jax.random.uniform(kw, (fan_in, fan_out), jnp.float32, -bound, bound)
        b = jax.random.uniform(kb, (1, fan_out), jnp.float32, -bound, bound)
        params.append((w_t, b))
    return params


def reference_forward(x, params):
    def lin(h, p):
        return h @ p[0] + p[1]

    h = jnp.tanh(lin(x, params[0]))          # g + tanh
    h = lin(h, params[1])                    # encode1
    h = lin(h, params[2])                    # encode2
    h = jax.nn.sigmoid(lin(h, params[3]))    # encode3 + sigmoid
    h = lin(h, params[4])                    # decode1
    h = lin(h, params[5])                    # decode2
    h = lin(h, params[6])                    # decode3
    return jax.nn.sigmoid(lin(h, params[7]))  # h + sigmoid


if __name__ == "__main__":
    # Shapes consistent with the module's constructor; batch chosen so the
    # auto-selected tile runs the whole call in a single grid step.
    batch = 256
    num_question = 128
    code1, code2, code3, code_vect = 64, 32, 16, 8

    layer_dims = [
        (num_question, code1),  # g
        (code1, code2),         # encode1
        (code2, code3),         # encode2
        (code3, code_vect),     # encode3
        (code_vect, code3),     # decode1
        (code3, code2),         # decode2
        (code2, code1),         # decode3
        (code1, num_question),  # h
    ]

    key = jax.random.PRNGKey(0)
    kx, kp = jax.random.split(key)
    x = jax.random.uniform(kx, (batch, num_question), jnp.float32)
    params = init_params(kp, layer_dims)
    ref = reference_forward(x, params)

    # 1) Tight semantic check with an f32 weight slab (matches the PyTorch
    #    forward to f32/MXU rounding).
    w_f32, b_f32 = pack_params(params, pad=128, weights_dtype=jnp.float32)
    out_f32 = jax.block_until_ready(autoencoder_forward(x, w_f32, b_f32))
    assert out_f32.shape == (batch, num_question)
    assert jnp.allclose(out_f32, ref, atol=1e-4, rtol=1e-4), "f32 mismatch vs reference"

    # 2) Performance-default path: bf16 weight slab (half the exposed weight DMA,
    #    native-rate MXU), f32 accumulation/activations. Relaxed tolerance for
    #    bf16 rounding of weights/activations fed to the MXU.
    w_bf16, b_bf16 = pack_params(params, pad=128, weights_dtype=jnp.bfloat16)
    out_bf16 = jax.block_until_ready(autoencoder_forward(x, w_bf16, b_bf16))
    assert out_bf16.shape == (batch, num_question)
    assert jnp.allclose(out_bf16, ref, atol=2e-2, rtol=2e-2), "bf16 mismatch vs reference"

    print("KERNEL_OK")
</pallas_src>

<mosaic_0001>
module attributes {stable_mosaic.version = 11 : i64} {
  func.func @autoencoder_kernel(%arg0: i32, %arg1: memref<256x128xf32, #tpu.memory_space<vmem>>, %arg2: memref<8x128x128xf32, #tpu.memory_space<vmem>>, %arg3: memref<8x1x128xf32, #tpu.memory_space<vmem>>, %arg4: memref<256x128xf32, #tpu.memory_space<vmem>>) attributes {dimension_semantics = [#tpu.dimension_semantics<parallel>], iteration_bounds = array<i64: 1>, scalar_prefetch = 0 : i64, scratch_operands = 0 : i64, tpu.core_type = #tpu.core_type<tc>, window_params = [{transform_indices = @transform_0, window_bounds = array<i64: 256, 128>}, {pipeline_mode = #tpu.pipeline_mode<synchronous>, transform_indices = @transform_1, window_bounds = array<i64: 8, 128, 128>}, {pipeline_mode = #tpu.pipeline_mode<synchronous>, transform_indices = @transform_2, window_bounds = array<i64: 8, 1, 128>}, {transform_indices = @transform_3, window_bounds = array<i64: 256, 128>}]} {
    %c0 = arith.constant 0 : index
    %c0_0 = arith.constant 0 : index
    %0 = vector.load %arg1[%c0, %c0_0] : memref<256x128xf32, #tpu.memory_space<vmem>>, vector<256x128xf32>
    %c0_1 = arith.constant 0 : index
    %c0_2 = arith.constant 0 : index
    %c0_3 = arith.constant 0 : index
    %1 = vector.load %arg2[%c0_1, %c0_2, %c0_3] : memref<8x128x128xf32, #tpu.memory_space<vmem>>, vector<1x128x128xf32>
    %2 = vector.shape_cast %1 : vector<1x128x128xf32> to vector<128x128xf32>
    %c0_4 = arith.constant 0 : index
    %c0_5 = arith.constant 0 : index
    %c0_6 = arith.constant 0 : index
    %3 = vector.load %arg3[%c0_4, %c0_5, %c0_6] : memref<8x1x128xf32, #tpu.memory_space<vmem>>, vector<1x1x128xf32>
    %4 = vector.shape_cast %3 : vector<1x1x128xf32> to vector<1x128xf32>
    %cst = arith.constant dense<0.000000e+00> : vector<256x128xf32>
    %5 = tpu.matmul %0, %2, %cst {dimension_numbers = #tpu.dot_dimension_numbers<[1], [0], [0], [1], [0, 0, 1, 1], [], []>} : vector<256x128xf32>, vector<128x128xf32>, vector<256x128xf32> -> vector<256x128xf32>
    %6 = vector.broadcast %4 : vector<1x128xf32> to vector<256x128xf32>
    %7 = arith.addf %5, %6 : vector<256x128xf32>
    %8 = math.tanh %7 : vector<256x128xf32>
    %c1 = arith.constant 1 : index
    %c0_7 = arith.constant 0 : index
    %c0_8 = arith.constant 0 : index
    %9 = vector.load %arg2[%c1, %c0_7, %c0_8] : memref<8x128x128xf32, #tpu.memory_space<vmem>>, vector<1x128x128xf32>
    %10 = vector.shape_cast %9 : vector<1x128x128xf32> to vector<128x128xf32>
    %c1_9 = arith.constant 1 : index
    %c0_10 = arith.constant 0 : index
    %c0_11 = arith.constant 0 : index
    %11 = vector.load %arg3[%c1_9, %c0_10, %c0_11] : memref<8x1x128xf32, #tpu.memory_space<vmem>>, vector<1x1x128xf32>
    %12 = vector.shape_cast %11 : vector<1x1x128xf32> to vector<1x128xf32>
    %cst_12 = arith.constant dense<0.000000e+00> : vector<256x128xf32>
    %13 = tpu.matmul %8, %10, %cst_12 {dimension_numbers = #tpu.dot_dimension_numbers<[1], [0], [0], [1], [0, 0, 1, 1], [], []>} : vector<256x128xf32>, vector<128x128xf32>, vector<256x128xf32> -> vector<256x128xf32>
    %14 = vector.broadcast %12 : vector<1x128xf32> to vector<256x128xf32>
    %15 = arith.addf %13, %14 : vector<256x128xf32>
    %c2 = arith.constant 2 : index
    %c0_13 = arith.constant 0 : index
    %c0_14 = arith.constant 0 : index
    %16 = vector.load %arg2[%c2, %c0_13, %c0_14] : memref<8x128x128xf32, #tpu.memory_space<vmem>>, vector<1x128x128xf32>
    %17 = vector.shape_cast %16 : vector<1x128x128xf32> to vector<128x128xf32>
    %c2_15 = arith.constant 2 : index
    %c0_16 = arith.constant 0 : index
    %c0_17 = arith.constant 0 : index
    %18 = vector.load %arg3[%c2_15, %c0_16, %c0_17] : memref<8x1x128xf32, #tpu.memory_space<vmem>>, vector<1x1x128xf32>
    %19 = vector.shape_cast %18 : vector<1x1x128xf32> to vector<1x128xf32>
    %cst_18 = arith.constant dense<0.000000e+00> : vector<256x128xf32>
    %20 = tpu.matmul %15, %17, %cst_18 {dimension_numbers = #tpu.dot_dimension_numbers<[1], [0], [0], [1], [0, 0, 1, 1], [], []>} : vector<256x128xf32>, vector<128x128xf32>, vector<256x128xf32> -> vector<256x128xf32>
    %21 = vector.broadcast %19 : vector<1x128xf32> to vector<256x128xf32>
    %22 = arith.addf %20, %21 : vector<256x128xf32>
    %c3 = arith.constant 3 : index
    %c0_19 = arith.constant 0 : index
    %c0_20 = arith.constant 0 : index
    %23 = vector.load %arg2[%c3, %c0_19, %c0_20] : memref<8x128x128xf32, #tpu.memory_space<vmem>>, vector<1x128x128xf32>
    %24 = vector.shape_cast %23 : vector<1x128x128xf32> to vector<128x128xf32>
    %c3_21 = arith.constant 3 : index
    %c0_22 = arith.constant 0 : index
    %c0_23 = arith.constant 0 : index
    %25 = vector.load %arg3[%c3_21, %c0_22, %c0_23] : memref<8x1x128xf32, #tpu.memory_space<vmem>>, vector<1x1x128xf32>
    %26 = vector.shape_cast %25 : vector<1x1x128xf32> to vector<1x128xf32>
    %cst_24 = arith.constant dense<0.000000e+00> : vector<256x128xf32>
    %27 = tpu.matmul %22, %24, %cst_24 {dimension_numbers = #tpu.dot_dimension_numbers<[1], [0], [0], [1], [0, 0, 1, 1], [], []>} : vector<256x128xf32>, vector<128x128xf32>, vector<256x128xf32> -> vector<256x128xf32>
    %28 = vector.broadcast %26 : vector<1x128xf32> to vector<256x128xf32>
    %29 = arith.addf %27, %28 : vector<256x128xf32>
    %cst_25 = arith.constant 5.000000e-01 : f32
    %30 = vector.broadcast %cst_25 : f32 to vector<256x128xf32>
    %31 = arith.mulf %30, %29 : vector<256x128xf32>
    %32 = math.tanh %31 : vector<256x128xf32>
    %cst_26 = arith.constant 1.000000e+00 : f32
    %33 = vector.broadcast %cst_26 : f32 to vector<256x128xf32>
    %34 = arith.addf %32, %33 : vector<256x128xf32>
    %cst_27 = arith.constant 5.000000e-01 : f32
    %35 = vector.broadcast %cst_27 : f32 to vector<256x128xf32>
    %36 = arith.mulf %35, %34 : vector<256x128xf32>
    %c4 = arith.constant 4 : index
    %c0_28 = arith.constant 0 : index
    %c0_29 = arith.constant 0 : index
    %37 = vector.load %arg2[%c4, %c0_28, %c0_29] : memref<8x128x128xf32, #tpu.memory_space<vmem>>, vector<1x128x128xf32>
    %38 = vector.shape_cast %37 : vector<1x128x128xf32> to vector<128x128xf32>
    %c4_30 = arith.constant 4 : index
    %c0_31 = arith.constant 0 : index
    %c0_32 = arith.constant 0 : index
    %39 = vector.load %arg3[%c4_30, %c0_31, %c0_32] : memref<8x1x128xf32, #tpu.memory_space<vmem>>, vector<1x1x128xf32>
    %40 = vector.shape_cast %39 : vector<1x1x128xf32> to vector<1x128xf32>
    %cst_33 = arith.constant dense<0.000000e+00> : vector<256x128xf32>
    %41 = tpu.matmul %36, %38, %cst_33 {dimension_numbers = #tpu.dot_dimension_numbers<[1], [0], [0], [1], [0, 0, 1, 1], [], []>} : vector<256x128xf32>, vector<128x128xf32>, vector<256x128xf32> -> vector<256x128xf32>
    %42 = vector.broadcast %40 : vector<1x128xf32> to vector<256x128xf32>
    %43 = arith.addf %41, %42 : vector<256x128xf32>
    %c5 = arith.constant 5 : index
    %c0_34 = arith.constant 0 : index
    %c0_35 = arith.constant 0 : index
    %44 = vector.load %arg2[%c5, %c0_34, %c0_35] : memref<8x128x128xf32, #tpu.memory_space<vmem>>, vector<1x128x128xf32>
    %45 = vector.shape_cast %44 : vector<1x128x128xf32> to vector<128x128xf32>
    %c5_36 = arith.constant 5 : index
    %c0_37 = arith.constant 0 : index
    %c0_38 = arith.constant 0 : index
    %46 = vector.load %arg3[%c5_36, %c0_37, %c0_38] : memref<8x1x128xf32, #tpu.memory_space<vmem>>, vector<1x1x128xf32>
    %47 = vector.shape_cast %46 : vector<1x1x128xf32> to vector<1x128xf32>
    %cst_39 = arith.constant dense<0.000000e+00> : vector<256x128xf32>
    %48 = tpu.matmul %43, %45, %cst_39 {dimension_numbers = #tpu.dot_dimension_numbers<[1], [0], [0], [1], [0, 0, 1, 1], [], []>} : vector<256x128xf32>, vector<128x128xf32>, vector<256x128xf32> -> vector<256x128xf32>
    %49 = vector.broadcast %47 : vector<1x128xf32> to vector<256x128xf32>
    %50 = arith.addf %48, %49 : vector<256x128xf32>
    %c6 = arith.constant 6 : index
    %c0_40 = arith.constant 0 : index
    %c0_41 = arith.constant 0 : index
    %51 = vector.load %arg2[%c6, %c0_40, %c0_41] : memref<8x128x128xf32, #tpu.memory_space<vmem>>, vector<1x128x128xf32>
    %52 = vector.shape_cast %51 : vector<1x128x128xf32> to vector<128x128xf32>
    %c6_42 = arith.constant 6 : index
    %c0_43 = arith.constant 0 : index
    %c0_44 = arith.constant 0 : index
    %53 = vector.load %arg3[%c6_42, %c0_43, %c0_44] : memref<8x1x128xf32, #tpu.memory_space<vmem>>, vector<1x1x128xf32>
    %54 = vector.shape_cast %53 : vector<1x1x128xf32> to vector<1x128xf32>
    %cst_45 = arith.constant dense<0.000000e+00> : vector<256x128xf32>
    %55 = tpu.matmul %50, %52, %cst_45 {dimension_numbers = #tpu.dot_dimension_numbers<[1], [0], [0], [1], [0, 0, 1, 1], [], []>} : vector<256x128xf32>, vector<128x128xf32>, vector<256x128xf32> -> vector<256x128xf32>
    %56 = vector.broadcast %54 : vector<1x128xf32> to vector<256x128xf32>
    %57 = arith.addf %55, %56 : vector<256x128xf32>
    %c7 = arith.constant 7 : index
    %c0_46 = arith.constant 0 : index
    %c0_47 = arith.constant 0 : index
    %58 = vector.load %arg2[%c7, %c0_46, %c0_47] : memref<8x128x128xf32, #tpu.memory_space<vmem>>, vector<1x128x128xf32>
    %59 = vector.shape_cast %58 : vector<1x128x128xf32> to vector<128x128xf32>
    %c7_48 = arith.constant 7 : index
    %c0_49 = arith.constant 0 : index
    %c0_50 = arith.constant 0 : index
    %60 = vector.load %arg3[%c7_48, %c0_49, %c0_50] : memref<8x1x128xf32, #tpu.memory_space<vmem>>, vector<1x1x128xf32>
    %61 = vector.shape_cast %60 : vector<1x1x128xf32> to vector<1x128xf32>
    %cst_51 = arith.constant dense<0.000000e+00> : vector<256x128xf32>
    %62 = tpu.matmul %57, %59, %cst_51 {dimension_numbers = #tpu.dot_dimension_numbers<[1], [0], [0], [1], [0, 0, 1, 1], [], []>} : vector<256x128xf32>, vector<128x128xf32>, vector<256x128xf32> -> vector<256x128xf32>
    %63 = vector.broadcast %61 : vector<1x128xf32> to vector<256x128xf32>
    %64 = arith.addf %62, %63 : vector<256x128xf32>
    %cst_52 = arith.constant 5.000000e-01 : f32
    %65 = vector.broadcast %cst_52 : f32 to vector<256x128xf32>
    %66 = arith.mulf %65, %64 : vector<256x128xf32>
    %67 = math.tanh %66 : vector<256x128xf32>
    %cst_53 = arith.constant 1.000000e+00 : f32
    %68 = vector.broadcast %cst_53 : f32 to vector<256x128xf32>
    %69 = arith.addf %67, %68 : vector<256x128xf32>
    %cst_54 = arith.constant 5.000000e-01 : f32
    %70 = vector.broadcast %cst_54 : f32 to vector<256x128xf32>
    %71 = arith.mulf %70, %69 : vector<256x128xf32>
    %c0_55 = arith.constant 0 : index
    %c0_56 = arith.constant 0 : index
    %72 = vector.load %arg4[%c0_55, %c0_56] : memref<256x128xf32, #tpu.memory_space<vmem>>, vector<256x128xf32>
    tpu.vector_store %arg4[%c0_55, %c0_56], %71 {strides = array<i32>} : memref<256x128xf32, #tpu.memory_space<vmem>>, vector<256x128xf32>,
    return
  }
  func.func @transform_0(%arg0: i32) -> (i32, i32) {
    %c0_i32 = arith.constant 0 : i32
    %c0_i32_0 = arith.constant 0 : i32
    return %arg0, %c0_i32 : i32, i32
  }
  func.func @transform_1(%arg0: i32) -> (i32, i32, i32) {
    %c0_i32 = arith.constant 0 : i32
    %c0_i32_0 = arith.constant 0 : i32
    %c0_i32_1 = arith.constant 0 : i32
    %c0_i32_2 = arith.constant 0 : i32
    return %c0_i32, %c0_i32_0, %c0_i32_1 : i32, i32, i32
  }
  func.func @transform_2(%arg0: i32) -> (i32, i32, i32) {
    %c0_i32 = arith.constant 0 : i32
    %c0_i32_0 = arith.constant 0 : i32
    %c0_i32_1 = arith.constant 0 : i32
    %c0_i32_2 = arith.constant 0 : i32
    return %c0_i32, %c0_i32_0, %c0_i32_1 : i32, i32, i32
  }
  func.func @transform_3(%arg0: i32) -> (i32, i32) {
    %c0_i32 = arith.constant 0 : i32
    %c0_i32_0 = arith.constant 0 : i32
    return %arg0, %c0_i32 : i32, i32
  }
}

</mosaic_0001>

<llo_original>
// kernel: autoencoder_forward.1
$region0: #{autoencoder_forward.1}
  #allocation0 [shape = 'u32[]', space=smem, size = 0x4, offset = 0x4, fixed_abs, tag = 'smem constant byte address 0x4 - core index']
  #allocation1 [shape = 'u32[72,128]{1,0:T(1,128)}', space=vmem, size = 0x9000, scoped, tag = 'internal scratch']
  %s0 = inlined_call_operand.hbm [shape: f32[256,128], index: 0, kind: input, shape index: {}]
  %s1 = inlined_call_operand.hbm [shape: f32[8,128,128], index: 1, kind: input, shape index: {}]
  %s2 = inlined_call_operand.hbm [shape: f32[8,1,128], index: 2, kind: input, shape index: {}]
  %s3 = inlined_call_operand.hbm [shape: f32[256,128], index: 3, kind: output, shape index: {}]
  %s4 = sld [smem:[#allocation0]]
  $region34: #{autoencoder_forward.1} parent=0
    _
  %s6 = ssub.s32 1, %s4
  %s7 = scalar_select 0, %s6, %s4
  $region1: #{autoencoder_forward.1} parent=0
    #allocation2 [shape = 'u8[131072]{0}', space=vmem, size = 0x20000, scoped, tag = 'input window, operand 0, single buffered']
    #allocation3 [shape = 's32[1]{0}', space=sflag, size = 0x4, scoped, tag = 'scoped memory for autoencoder_forward.1']
    #allocation4 [shape = 's32[1]{0}', space=sflag, size = 0x4, scoped, tag = 'scoped memory for autoencoder_forward.1']
    #allocation5 [shape = 'u8[524288]{0}', space=vmem, size = 0x80000, scoped, tag = 'input window, operand 1, single buffered']
    #allocation6 [shape = 's32[1]{0}', space=sflag, size = 0x4, scoped, tag = 'scoped memory for autoencoder_forward.1']
    #allocation7 [shape = 'u8[4096]{0}', space=vmem, size = 0x1000, scoped, tag = 'input window, operand 2, single buffered']
    #allocation8 [shape = 'u8[131072]{0}', space=vmem, size = 0x20000, scoped, tag = 'output window, operand 0, single buffered']
    %8 = vsyncpa [#allocation3], 0
    %9 = vsyncpa [#allocation6], 0
    %10 = vsyncpa [#allocation4], 0
    // Predicated region
    $region2: #{autoencoder_forward.1} parent=1 // pred_check
      _
    $region3: #{autoencoder_forward.1} parent=1 // pred_check_branch
      %12 = sbr.rel (0) target = $region5
    $region4: #{autoencoder_forward.1} parent=1 // pred_region
      %14 = vsyncadd [#allocation3], 0
      %s15 = sshll.u32 %s0, 4
      %s16 = int_to_ptr.hbm [resolvable:$true] %s15
      %s17 = sshll.u32 [#allocation2], 4
      %s18 = int_to_ptr.vmem [resolvable:$true] %s17
      %23 = dma.hbm_to_vmem [thread:$0]  %s16, 4096, %s18, [#allocation3], 128, 128, 8
    $region5: #{autoencoder_forward.1} parent=1 // pred_fallthru
      _
    // Predicated region
    $region6: #{autoencoder_forward.1} parent=1 // pred_check
      _
    $region7: #{autoencoder_forward.1} parent=1 // pred_check_branch
      %25 = sbr.rel (0) target = $region9
    $region8: #{autoencoder_forward.1} parent=1 // pred_region
      %27 = vsyncadd [#allocation6], 0
      %s28 = sshll.u32 %s1, 4
      %s29 = int_to_ptr.hbm [resolvable:$true] %s28
      %s30 = sshll.u32 [#allocation5], 4
      %s31 = int_to_ptr.vmem [resolvable:$true] %s30
      %36 = dma.hbm_to_vmem [thread:$0]  %s29, 16384, %s31, [#allocation6], 128, 128, 8
    $region9: #{autoencoder_forward.1} parent=1 // pred_fallthru
      _
    // Predicated region
    $region10: #{autoencoder_forward.1} parent=1 // pred_check
      _
    $region11: #{autoencoder_forward.1} parent=1 // pred_check_branch
      %38 = sbr.rel (0) target = $region13
    $region12: #{autoencoder_forward.1} parent=1 // pred_region
      %40 = vsyncadd [#allocation6], 0
      %s41 = sshll.u32 %s2, 4
      %s42 = int_to_ptr.hbm [resolvable:$true] %s41
      %s43 = sshll.u32 [#allocation7], 4
      %s44 = int_to_ptr.vmem [resolvable:$true] %s43
      %49 = dma.hbm_to_vmem [thread:$0]  %s42, 128, %s44, [#allocation6], 16, 16, 1
    $region13: #{autoencoder_forward.1} parent=1 // pred_fallthru
      _
    // Predicated region
    $region14: #{autoencoder_forward.1} parent=1 // pred_check
      _
    $region15: #{autoencoder_forward.1} parent=1 // pred_check_branch
      %51 = sbr.rel (0) target = $region17
    $region16: #{autoencoder_forward.1} parent=1 // pred_region
      %53 = dma.done [#allocation3], 4096
    $region17: #{autoencoder_forward.1} parent=1 // pred_fallthru
      _
    // Predicated region
    $region18: #{autoencoder_forward.1} parent=1 // pred_check
      _
    $region19: #{autoencoder_forward.1} parent=1 // pred_check_branch
      %55 = sbr.rel (0) target = $region21
    $region20: #{autoencoder_forward.1} parent=1 // pred_region
      %57 = dma.done [#allocation6], 16384
    $region21: #{autoencoder_forward.1} parent=1 // pred_fallthru
      _
    // Predicated region
    $region22: #{autoencoder_forward.1} parent=1 // pred_check
      _
    $region23: #{autoencoder_forward.1} parent=1 // pred_check_branch
      %59 = sbr.rel (0) target = $region25
    $region24: #{autoencoder_forward.1} parent=1 // pred_region
      %61 = dma.done [#allocation6], 128
    $region25: #{autoencoder_forward.1} parent=1 // pred_fallthru
      _
    %v62 = vld [vmem:[#allocation2] sm:$0xff]
    %v63 = vld [vmem:[#allocation2 + $0x8] sm:$0xff]
    %v64 = vld [vmem:[#allocation2 + $0x10] sm:$0xff]
    %v65 = vld [vmem:[#allocation2 + $0x18] sm:$0xff]
    %v66 = vld [vmem:[#allocation2 + $0x20] sm:$0xff]
    %v67 = vld [vmem:[#allocation2 + $0x28] sm:$0xff]
    %v68 = vld [vmem:[#allocation2 + $0x30] sm:$0xff]
    %v69 = vld [vmem:[#allocation2 + $0x38] sm:$0xff]
    %v70 = vld [vmem:[#allocation2 + $0x40] sm:$0xff]
    %v71 = vld [vmem:[#allocation2 + $0x48] sm:$0xff]
    %v72 = vld [vmem:[#allocation2 + $0x50] sm:$0xff]
    %v73 = vld [vmem:[#allocation2 + $0x58] sm:$0xff]
    %v74 = vld [vmem:[#allocation2 + $0x60] sm:$0xff]
    %v75 = vld [vmem:[#allocation2 + $0x68] sm:$0xff]
    %v76 = vld [vmem:[#allocation2 + $0x70] sm:$0xff]
    %v77 = vld [vmem:[#allocation2 + $0x78] sm:$0xff]
    %v78 = vld [vmem:[#allocation2 + $0x80] sm:$0xff]
    %v79 = vld [vmem:[#allocation2 + $0x88] sm:$0xff]
    %v80 = vld [vmem:[#allocation2 + $0x90] sm:$0xff]
    %v81 = vld [vmem:[#allocation2 + $0x98] sm:$0xff]
    %v82 = vld [vmem:[#allocation2 + $0xa0] sm:$0xff]
    %v83 = vld [vmem:[#allocation2 + $0xa8] sm:$0xff]
    %v84 = vld [vmem:[#allocation2 + $0xb0] sm:$0xff]
    %v85 = vld [vmem:[#allocation2 + $0xb8] sm:$0xff]
    %v86 = vld [vmem:[#allocation2 + $0xc0] sm:$0xff]
    %v87 = vld [vmem:[#allocation2 + $0xc8] sm:$0xff]
    %v88 = vld [vmem:[#allocation2 + $0xd0] sm:$0xff]
    %v89 = vld [vmem:[#allocation2 + $0xd8] sm:$0xff]
    %v90 = vld [vmem:[#allocation2 + $0xe0] sm:$0xff]
    %v91 = vld [vmem:[#allocation2 + $0xe8] sm:$0xff]
    %v92 = vld [vmem:[#allocation2 + $0xf0] sm:$0xff]
    %v93 = vld [vmem:[#allocation2 + $0xf8] sm:$0xff]
    %v94 = vld [vmem:[#allocation5] sm:$0xff]
    %v95 = vld [vmem:[#allocation5 + $0x8] sm:$0xff]
    %v96 = vld [vmem:[#allocation5 + $0x10] sm:$0xff]
    %v97 = vld [vmem:[#allocation5 + $0x18] sm:$0xff]
    %v98 = vld [vmem:[#allocation5 + $0x20] sm:$0xff]
    %v99 = vld [vmem:[#allocation5 + $0x28] sm:$0xff]
    %v100 = vld [vmem:[#allocation5 + $0x30] sm:$0xff]
    %v101 = vld [vmem:[#allocation5 + $0x38] sm:$0xff]
    %v102 = vld [vmem:[#allocation5 + $0x40] sm:$0xff]
    %v103 = vld [vmem:[#allocation5 + $0x48] sm:$0xff]
    %v104 = vld [vmem:[#allocation5 + $0x50] sm:$0xff]
    %v105 = vld [vmem:[#allocation5 + $0x58] sm:$0xff]
    %v106 = vld [vmem:[#allocation5 + $0x60] sm:$0xff]
    %v107 = vld [vmem:[#allocation5 + $0x68] sm:$0xff]
    %v108 = vld [vmem:[#allocation5 + $0x70] sm:$0xff]
    %v109 = vld [vmem:[#allocation5 + $0x78] sm:$0xff]
    %v110 = vld [vmem:[#allocation7] sm:$0x1]
    %v112 = vperm.slane %v110, 0
    %114 = vmatpush.msra.mxu0 %v109
    %115 = vmatpush.msra.mxu0 %v108
    %116 = vmatpush.msra.mxu0 %v107
    %117 = vmatpush.msra.mxu0 %v106
    %118 = vmatpush.msra.mxu0 %v105
    %119 = vmatpush.msra.mxu0 %v104
    %120 = vmatpush.msra.mxu0 %v103
    %121 = vmatpush.msra.mxu0 %v102
    %122 = vmatpush.msra.mxu0 %v101
    %123 = vmatpush.msra.mxu0 %v100
    %124 = vmatpush.msra.mxu0 %v99
    %125 = vmatpush.msra.mxu0 %v98
    %126 = vmatpush.msra.mxu0 %v97
    %127 = vmatpush.msra.mxu0 %v96
    %128 = vmatpush.msra.mxu0 %v95
    %129 = vmatpush.msra.mxu0 %v94
    %130 = vmatmul.f32.gmra.mxu0 %v62
    %v131 = vpop.f32.mrf.mxu0
    %v132 = vadd.f32 %v112, %v131
    %133 = vmatmul.f32.gmra.mxu0 %v63
    %v134 = vpop.f32.mrf.mxu0
    %v135 = vadd.f32 %v112, %v134
    %136 = vmatmul.f32.gmra.mxu0 %v64
    %v137 = vpop.f32.mrf.mxu0
    %v138 = vadd.f32 %v112, %v137
    %139 = vmatmul.f32.gmra.mxu0 %v65
    %v140 = vpop.f32.mrf.mxu0
    %v141 = vadd.f32 %v112, %v140
    %142 = vmatmul.f32.gmra.mxu0 %v66
    %v143 = vpop.f32.mrf.mxu0
    %v144 = vadd.f32 %v112, %v143
    %145 = vmatmul.f32.gmra.mxu0 %v67
    %v146 = vpop.f32.mrf.mxu0
    %v147 = vadd.f32 %v112, %v146
    %148 = vmatmul.f32.gmra.mxu0 %v68
    %v149 = vpop.f32.mrf.mxu0
    %v150 = vadd.f32 %v112, %v149
    %151 = vmatmul.f32.gmra.mxu0 %v69
    %v152 = vpop.f32.mrf.mxu0
    %v153 = vadd.f32 %v112, %v152
    %154 = vmatmul.f32.gmra.mxu0 %v70
    %v155 = vpop.f32.mrf.mxu0
    %v156 = vadd.f32 %v112, %v155
    %157 = vmatmul.f32.gmra.mxu0 %v71
    %v158 = vpop.f32.mrf.mxu0
    %v159 = vadd.f32 %v112, %v158
    %160 = vmatmul.f32.gmra.mxu0 %v72
    %v161 = vpop.f32.mrf.mxu0
    %v162 = vadd.f32 %v112, %v161
    %163 = vmatmul.f32.gmra.mxu0 %v73
    %v164 = vpop.f32.mrf.mxu0
    %v165 = vadd.f32 %v112, %v164
    %166 = vmatmul.f32.gmra.mxu0 %v74
    %v167 = vpop.f32.mrf.mxu0
    %v168 = vadd.f32 %v112, %v167
    %169 = vmatmul.f32.gmra.mxu0 %v75
    %v170 = vpop.f32.mrf.mxu0
    %v171 = vadd.f32 %v112, %v170
    %172 = vmatmul.f32.gmra.mxu0 %v76
    %v173 = vpop.f32.mrf.mxu0
    %v174 = vadd.f32 %v112, %v173
    %175 = vmatmul.f32.gmra.mxu0 %v77
    %v176 = vpop.f32.mrf.mxu0
    %v177 = vadd.f32 %v112, %v176
    %178 = vmatmul.f32.gmra.mxu0 %v78
    %v179 = vpop.f32.mrf.mxu0
    %v180 = vadd.f32 %v112, %v179
    %181 = vmatmul.f32.gmra.mxu0 %v79
    %v182 = vpop.f32.mrf.mxu0
    %v183 = vadd.f32 %v112, %v182
    %184 = vmatmul.f32.gmra.mxu0 %v80
    %v185 = vpop.f32.mrf.mxu0
    %v186 = vadd.f32 %v112, %v185
    %187 = vmatmul.f32.gmra.mxu0 %v81
    %v188 = vpop.f32.mrf.mxu0
    %v189 = vadd.f32 %v112, %v188
    %190 = vmatmul.f32.gmra.mxu0 %v82
    %v191 = vpop.f32.mrf.mxu0
    %v192 = vadd.f32 %v112, %v191
    %193 = vmatmul.f32.gmra.mxu0 %v83
    %v194 = vpop.f32.mrf.mxu0
    %v195 = vadd.f32 %v112, %v194
    %196 = vmatmul.f32.gmra.mxu0 %v84
    %v197 = vpop.f32.mrf.mxu0
    %v198 = vadd.f32 %v112, %v197
    %199 = vmatmul.f32.gmra.mxu0 %v85
    %v200 = vpop.f32.mrf.mxu0
    %v201 = vadd.f32 %v112, %v200
    %202 = vmatmul.f32.gmra.mxu0 %v86
    %v203 = vpop.f32.mrf.mxu0
    %v204 = vadd.f32 %v112, %v203
    %205 = vmatmul.f32.gmra.mxu0 %v87
    %v206 = vpop.f32.mrf.mxu0
    %v207 = vadd.f32 %v112, %v206
    %208 = vmatmul.f32.gmra.mxu0 %v88
    %v209 = vpop.f32.mrf.mxu0
    %v210 = vadd.f32 %v112, %v209
    %211 = vmatmul.f32.gmra.mxu0 %v89
    %v212 = vpop.f32.mrf.mxu0
    %v213 = vadd.f32 %v112, %v212
    %214 = vmatmul.f32.gmra.mxu0 %v90
    %v215 = vpop.f32.mrf.mxu0
    %v216 = vadd.f32 %v112, %v215
    %217 = vmatmul.f32.gmra.mxu0 %v91
    %v218 = vpop.f32.mrf.mxu0
    %v219 = vadd.f32 %v112, %v218
    %220 = vmatmul.f32.gmra.mxu0 %v92
    %v221 = vpop.f32.mrf.mxu0
    %v222 = vadd.f32 %v112, %v221
    %223 = vmatmul.f32.gmra.mxu0 %v93
    %v224 = vpop.f32.mrf.mxu0
    %v225 = vadd.f32 %v112, %v224
    %226 = vdwg.mxu0
    %v227 = vtanh.pop %v132
    %v228 = vtanh.pop %v135
    %v229 = vtanh.pop %v138
    %v230 = vtanh.pop %v141
    %v231 = vtanh.pop %v144
    %v232 = vtanh.pop %v147
    %v233 = vtanh.pop %v150
    %v234 = vtanh.pop %v153
    %v235 = vtanh.pop %v156
    %v236 = vtanh.pop %v159
    %v237 = vtanh.pop %v162
    %v238 = vtanh.pop %v165
    %v239 = vtanh.pop %v168
    %v240 = vtanh.pop %v171
    %v241 = vtanh.pop %v174
    %v242 = vtanh.pop %v177
    %v243 = vtanh.pop %v180
    %v244 = vtanh.pop %v183
    %v245 = vtanh.pop %v186
    %v246 = vtanh.pop %v189
    %v247 = vtanh.pop %v192
    %v248 = vtanh.pop %v195
    %v249 = vtanh.pop %v198
    %v250 = vtanh.pop %v201
    %v251 = vtanh.pop %v204
    %v252 = vtanh.pop %v207
    %v253 = vtanh.pop %v210
    %v254 = vtanh.pop %v213
    %v255 = vtanh.pop %v216
    %v256 = vtanh.pop %v219
    %v257 = vtanh.pop %v222
    %v258 = vtanh.pop %v225
    %s259 = scalar_lea.vmem [#allocation5], 128
    %v260 = vld [vmem:[%s259] sm:$0xff]
    %v261 = vld [vmem:[%s259 + $0x8] sm:$0xff]
    %v262 = vld [vmem:[%s259 + $0x10] sm:$0xff]
    %v263 = vld [vmem:[%s259 + $0x18] sm:$0xff]
    %v264 = vld [vmem:[%s259 + $0x20] sm:$0xff]
    %v265 = vld [vmem:[%s259 + $0x28] sm:$0xff]
    %v266 = vld [vmem:[%s259 + $0x30] sm:$0xff]
    %v267 = vld [vmem:[%s259 + $0x38] sm:$0xff]
    %v268 = vld [vmem:[%s259 + $0x40] sm:$0xff]
    %v269 = vld [vmem:[%s259 + $0x48] sm:$0xff]
    %v270 = vld [vmem:[%s259 + $0x50] sm:$0xff]
    %v271 = vld [vmem:[%s259 + $0x58] sm:$0xff]
    %v272 = vld [vmem:[%s259 + $0x60] sm:$0xff]
    %v273 = vld [vmem:[%s259 + $0x68] sm:$0xff]
    %v274 = vld [vmem:[%s259 + $0x70] sm:$0xff]
    %v275 = vld [vmem:[%s259 + $0x78] sm:$0xff]
    %s276 = scalar_lea.vmem [#allocation7], 1
    %v277 = vld [vmem:[%s276] sm:$0x1]
    %v279 = vperm.slane %v277, 0
    %281 = vmatpush.msra.mxu0 %v275
    %282 = vmatpush.msra.mxu0 %v274
    %283 = vmatpush.msra.mxu0 %v273
    %284 = vmatpush.msra.mxu0 %v272
    %285 = vmatpush.msra.mxu0 %v271
    %286 = vmatpush.msra.mxu0 %v270
    %287 = vmatpush.msra.mxu0 %v269
    %288 = vmatpush.msra.mxu0 %v268
    %289 = vmatpush.msra.mxu0 %v267
    %290 = vmatpush.msra.mxu0 %v266
    %291 = vmatpush.msra.mxu0 %v265
    %292 = vmatpush.msra.mxu0 %v264
    %293 = vmatpush.msra.mxu0 %v263
    %294 = vmatpush.msra.mxu0 %v262
    %295 = vmatpush.msra.mxu0 %v261
    %296 = vmatpush.msra.mxu0 %v260
    %297 = vmatmul.f32.gmra.mxu0 %v227
    %v298 = vpop.f32.mrf.mxu0
    %v299 = vadd.f32 %v279, %v298
    %300 = vmatmul.f32.gmra.mxu0 %v228
    %v301 = vpop.f32.mrf.mxu0
    %v302 = vadd.f32 %v279, %v301
    %303 = vmatmul.f32.gmra.mxu0 %v229
    %v304 = vpop.f32.mrf.mxu0
    %v305 = vadd.f32 %v279, %v304
    %306 = vmatmul.f32.gmra.mxu0 %v230
    %v307 = vpop.f32.mrf.mxu0
    %v308 = vadd.f32 %v279, %v307
    %309 = vmatmul.f32.gmra.mxu0 %v231
    %v310 = vpop.f32.mrf.mxu0
    %v311 = vadd.f32 %v279, %v310
    %312 = vmatmul.f32.gmra.mxu0 %v232
    %v313 = vpop.f32.mrf.mxu0
    %v314 = vadd.f32 %v279, %v313
    %315 = vmatmul.f32.gmra.mxu0 %v233
    %v316 = vpop.f32.mrf.mxu0
    %v317 = vadd.f32 %v279, %v316
    %318 = vmatmul.f32.gmra.mxu0 %v234
    %v319 = vpop.f32.mrf.mxu0
    %v320 = vadd.f32 %v279, %v319
    %321 = vmatmul.f32.gmra.mxu0 %v235
    %v322 = vpop.f32.mrf.mxu0
    %v323 = vadd.f32 %v279, %v322
    %324 = vmatmul.f32.gmra.mxu0 %v236
    %v325 = vpop.f32.mrf.mxu0
    %v326 = vadd.f32 %v279, %v325
    %327 = vmatmul.f32.gmra.mxu0 %v237
    %v328 = vpop.f32.mrf.mxu0
    %v329 = vadd.f32 %v279, %v328
    %330 = vmatmul.f32.gmra.mxu0 %v238
    %v331 = vpop.f32.mrf.mxu0
    %v332 = vadd.f32 %v279, %v331
    %333 = vmatmul.f32.gmra.mxu0 %v239
    %v334 = vpop.f32.mrf.mxu0
    %v335 = vadd.f32 %v279, %v334
    %336 = vmatmul.f32.gmra.mxu0 %v240
    %v337 = vpop.f32.mrf.mxu0
    %v338 = vadd.f32 %v279, %v337
    %339 = vmatmul.f32.gmra.mxu0 %v241
    %v340 = vpop.f32.mrf.mxu0
    %v341 = vadd.f32 %v279, %v340
    %342 = vmatmul.f32.gmra.mxu0 %v242
    %v343 = vpop.f32.mrf.mxu0
    %v344 = vadd.f32 %v279, %v343
    %345 = vmatmul.f32.gmra.mxu0 %v243
    %v346 = vpop.f32.mrf.mxu0
    %v347 = vadd.f32 %v279, %v346
    %348 = vmatmul.f32.gmra.mxu0 %v244
    %v349 = vpop.f32.mrf.mxu0
    %v350 = vadd.f32 %v279, %v349
    %351 = vmatmul.f32.gmra.mxu0 %v245
    %v352 = vpop.f32.mrf.mxu0
    %v353 = vadd.f32 %v279, %v352
    %354 = vmatmul.f32.gmra.mxu0 %v246
    %v355 = vpop.f32.mrf.mxu0
    %v356 = vadd.f32 %v279, %v355
    %357 = vmatmul.f32.gmra.mxu0 %v247
    %v358 = vpop.f32.mrf.mxu0
    %v359 = vadd.f32 %v279, %v358
    %360 = vmatmul.f32.gmra.mxu0 %v248
    %v361 = vpop.f32.mrf.mxu0
    %v362 = vadd.f32 %v279, %v361
    %363 = vmatmul.f32.gmra.mxu0 %v249
    %v364 = vpop.f32.mrf.mxu0
    %v365 = vadd.f32 %v279, %v364
    %366 = vmatmul.f32.gmra.mxu0 %v250
    %v367 = vpop.f32.mrf.mxu0
    %v368 = vadd.f32 %v279, %v367
    %369 = vmatmul.f32.gmra.mxu0 %v251
    %v370 = vpop.f32.mrf.mxu0
    %v371 = vadd.f32 %v279, %v370
    %372 = vmatmul.f32.gmra.mxu0 %v252
    %v373 = vpop.f32.mrf.mxu0
    %v374 = vadd.f32 %v279, %v373
    %375 = vmatmul.f32.gmra.mxu0 %v253
    %v376 = vpop.f32.mrf.mxu0
    %v377 = vadd.f32 %v279, %v376
    %378 = vmatmul.f32.gmra.mxu0 %v254
    %v379 = vpop.f32.mrf.mxu0
    %v380 = vadd.f32 %v279, %v379
    %381 = vmatmul.f32.gmra.mxu0 %v255
    %v382 = vpop.f32.mrf.mxu0
    %v383 = vadd.f32 %v279, %v382
    %384 = vmatmul.f32.gmra.mxu0 %v256
    %v385 = vpop.f32.mrf.mxu0
    %v386 = vadd.f32 %v279, %v385
    %387 = vmatmul.f32.gmra.mxu0 %v257
    %v388 = vpop.f32.mrf.mxu0
    %v389 = vadd.f32 %v279, %v388
    %390 = vmatmul.f32.gmra.mxu0 %v258
    %v391 = vpop.f32.mrf.mxu0
    %v392 = vadd.f32 %v279, %v391
    %393 = vdwg.mxu0
    %s394 = scalar_lea.vmem [#allocation5], 256
    %v395 = vld [vmem:[%s394] sm:$0xff]
    %v396 = vld [vmem:[%s394 + $0x8] sm:$0xff]
    %v397 = vld [vmem:[%s394 + $0x10] sm:$0xff]
    %v398 = vld [vmem:[%s394 + $0x18] sm:$0xff]
    %v399 = vld [vmem:[%s394 + $0x20] sm:$0xff]
    %v400 = vld [vmem:[%s394 + $0x28] sm:$0xff]
    %v401 = vld [vmem:[%s394 + $0x30] sm:$0xff]
    %v402 = vld [vmem:[%s394 + $0x38] sm:$0xff]
    %v403 = vld [vmem:[%s394 + $0x40] sm:$0xff]
    %v404 = vld [vmem:[%s394 + $0x48] sm:$0xff]
    %v405 = vld [vmem:[%s394 + $0x50] sm:$0xff]
    %v406 = vld [vmem:[%s394 + $0x58] sm:$0xff]
    %v407 = vld [vmem:[%s394 + $0x60] sm:$0xff]
    %v408 = vld [vmem:[%s394 + $0x68] sm:$0xff]
    %v409 = vld [vmem:[%s394 + $0x70] sm:$0xff]
    %v410 = vld [vmem:[%s394 + $0x78] sm:$0xff]
    %s411 = scalar_lea.vmem [#allocation7], 2
    %v412 = vld [vmem:[%s411] sm:$0x1]
    %v414 = vperm.slane %v412, 0
    %416 = vmatpush.msra.mxu0 %v410
    %417 = vmatpush.msra.mxu0 %v409
    %418 = vmatpush.msra.mxu0 %v408
    %419 = vmatpush.msra.mxu0 %v407
    %420 = vmatpush.msra.mxu0 %v406
    %421 = vmatpush.msra.mxu0 %v405
    %422 = vmatpush.msra.mxu0 %v404
    %423 = vmatpush.msra.mxu0 %v403
    %424 = vmatpush.msra.mxu0 %v402
    %425 = vmatpush.msra.mxu0 %v401
    %426 = vmatpush.msra.mxu0 %v400
    %427 = vmatpush.msra.mxu0 %v399
    %428 = vmatpush.msra.mxu0 %v398
    %429 = vmatpush.msra.mxu0 %v397
    %430 = vmatpush.msra.mxu0 %v396
    %431 = vmatpush.msra.mxu0 %v395
    %432 = vmatmul.f32.gmra.mxu0 %v299
    %v433 = vpop.f32.mrf.mxu0
    %v434 = vadd.f32 %v414, %v433
    %435 = vmatmul.f32.gmra.mxu0 %v302
    %v436 = vpop.f32.mrf.mxu0
    %v437 = vadd.f32 %v414, %v436
    %438 = vmatmul.f32.gmra.mxu0 %v305
    %v439 = vpop.f32.mrf.mxu0
    %v440 = vadd.f32 %v414, %v439
    %441 = vmatmul.f32.gmra.mxu0 %v308
    %v442 = vpop.f32.mrf.mxu0
    %v443 = vadd.f32 %v414, %v442
    %444 = vmatmul.f32.gmra.mxu0 %v311
    %v445 = vpop.f32.mrf.mxu0
    %v446 = vadd.f32 %v414, %v445
    %447 = vmatmul.f32.gmra.mxu0 %v314
    %v448 = vpop.f32.mrf.mxu0
    %v449 = vadd.f32 %v414, %v448
    %450 = vmatmul.f32.gmra.mxu0 %v317
    %v451 = vpop.f32.mrf.mxu0
    %v452 = vadd.f32 %v414, %v451
    %453 = vmatmul.f32.gmra.mxu0 %v320
    %v454 = vpop.f32.mrf.mxu0
    %v455 = vadd.f32 %v414, %v454
    %456 = vmatmul.f32.gmra.mxu0 %v323
    %v457 = vpop.f32.mrf.mxu0
    %v458 = vadd.f32 %v414, %v457
    %459 = vmatmul.f32.gmra.mxu0 %v326
    %v460 = vpop.f32.mrf.mxu0
    %v461 = vadd.f32 %v414, %v460
    %462 = vmatmul.f32.gmra.mxu0 %v329
    %v463 = vpop.f32.mrf.mxu0
    %v464 = vadd.f32 %v414, %v463
    %465 = vmatmul.f32.gmra.mxu0 %v332
    %v466 = vpop.f32.mrf.mxu0
    %v467 = vadd.f32 %v414, %v466
    %468 = vmatmul.f32.gmra.mxu0 %v335
    %v469 = vpop.f32.mrf.mxu0
    %v470 = vadd.f32 %v414, %v469
    %471 = vmatmul.f32.gmra.mxu0 %v338
    %v472 = vpop.f32.mrf.mxu0
    %v473 = vadd.f32 %v414, %v472
    %474 = vmatmul.f32.gmra.mxu0 %v341
    %v475 = vpop.f32.mrf.mxu0
    %v476 = vadd.f32 %v414, %v475
    %477 = vmatmul.f32.gmra.mxu0 %v344
    %v478 = vpop.f32.mrf.mxu0
    %v479 = vadd.f32 %v414, %v478
    %480 = vmatmul.f32.gmra.mxu0 %v347
    %v481 = vpop.f32.mrf.mxu0
    %v482 = vadd.f32 %v414, %v481
    %483 = vmatmul.f32.gmra.mxu0 %v350
    %v484 = vpop.f32.mrf.mxu0
    %v485 = vadd.f32 %v414, %v484
    %486 = vmatmul.f32.gmra.mxu0 %v353
    %v487 = vpop.f32.mrf.mxu0
    %v488 = vadd.f32 %v414, %v487
    %489 = vmatmul.f32.gmra.mxu0 %v356
    %v490 = vpop.f32.mrf.mxu0
    %v491 = vadd.f32 %v414, %v490
    %492 = vmatmul.f32.gmra.mxu0 %v359
    %v493 = vpop.f32.mrf.mxu0
    %v494 = vadd.f32 %v414, %v493
    %495 = vmatmul.f32.gmra.mxu0 %v362
    %v496 = vpop.f32.mrf.mxu0
    %v497 = vadd.f32 %v414, %v496
    %498 = vmatmul.f32.gmra.mxu0 %v365
    %v499 = vpop.f32.mrf.mxu0
    %v500 = vadd.f32 %v414, %v499
    %501 = vmatmul.f32.gmra.mxu0 %v368
    %v502 = vpop.f32.mrf.mxu0
    %v503 = vadd.f32 %v414, %v502
    %504 = vmatmul.f32.gmra.mxu0 %v371
    %v505 = vpop.f32.mrf.mxu0
    %v506 = vadd.f32 %v414, %v505
    %507 = vmatmul.f32.gmra.mxu0 %v374
    %v508 = vpop.f32.mrf.mxu0
    %v509 = vadd.f32 %v414, %v508
    %510 = vmatmul.f32.gmra.mxu0 %v377
    %v511 = vpop.f32.mrf.mxu0
    %v512 = vadd.f32 %v414, %v511
    %513 = vmatmul.f32.gmra.mxu0 %v380
    %v514 = vpop.f32.mrf.mxu0
    %v515 = vadd.f32 %v414, %v514
    %516 = vmatmul.f32.gmra.mxu0 %v383
    %v517 = vpop.f32.mrf.mxu0
    %v518 = vadd.f32 %v414, %v517
    %519 = vmatmul.f32.gmra.mxu0 %v386
    %v520 = vpop.f32.mrf.mxu0
    %v521 = vadd.f32 %v414, %v520
    %522 = vmatmul.f32.gmra.mxu0 %v389
    %v523 = vpop.f32.mrf.mxu0
    %v524 = vadd.f32 %v414, %v523
    %525 = vmatmul.f32.gmra.mxu0 %v392
    %v526 = vpop.f32.mrf.mxu0
    %v527 = vadd.f32 %v414, %v526
    %528 = vdwg.mxu0
    %s529 = scalar_lea.vmem [#allocation5], 384
    %v530 = vld [vmem:[%s529] sm:$0xff]
    %v531 = vld [vmem:[%s529 + $0x8] sm:$0xff]
    %v532 = vld [vmem:[%s529 + $0x10] sm:$0xff]
    %v533 = vld [vmem:[%s529 + $0x18] sm:$0xff]
    %v534 = vld [vmem:[%s529 + $0x20] sm:$0xff]
    %v535 = vld [vmem:[%s529 + $0x28] sm:$0xff]
    %v536 = vld [vmem:[%s529 + $0x30] sm:$0xff]
    %v537 = vld [vmem:[%s529 + $0x38] sm:$0xff]
    %v538 = vld [vmem:[%s529 + $0x40] sm:$0xff]
    %v539 = vld [vmem:[%s529 + $0x48] sm:$0xff]
    %v540 = vld [vmem:[%s529 + $0x50] sm:$0xff]
    %v541 = vld [vmem:[%s529 + $0x58] sm:$0xff]
    %v542 = vld [vmem:[%s529 + $0x60] sm:$0xff]
    %v543 = vld [vmem:[%s529 + $0x68] sm:$0xff]
    %v544 = vld [vmem:[%s529 + $0x70] sm:$0xff]
    %v545 = vld [vmem:[%s529 + $0x78] sm:$0xff]
    %s546 = scalar_lea.vmem [#allocation7], 3
    %v547 = vld [vmem:[%s546] sm:$0x1]
    %v549 = vperm.slane %v547, 0
    %551 = vmatpush.msra.mxu0 %v545
    %552 = vmatpush.msra.mxu0 %v544
    %553 = vmatpush.msra.mxu0 %v543
    %554 = vmatpush.msra.mxu0 %v542
    %555 = vmatpush.msra.mxu0 %v541
    %556 = vmatpush.msra.mxu0 %v540
    %557 = vmatpush.msra.mxu0 %v539
    %558 = vmatpush.msra.mxu0 %v538
    %559 = vmatpush.msra.mxu0 %v537
    %560 = vmatpush.msra.mxu0 %v536
    %561 = vmatpush.msra.mxu0 %v535
    %562 = vmatpush.msra.mxu0 %v534
    %563 = vmatpush.msra.mxu0 %v533
    %564 = vmatpush.msra.mxu0 %v532
    %565 = vmatpush.msra.mxu0 %v531
    %566 = vmatpush.msra.mxu0 %v530
    %567 = vmatmul.f32.gmra.mxu0 %v434
    %v568 = vpop.f32.mrf.mxu0
    %v569 = vadd.f32 %v549, %v568
    %570 = vmatmul.f32.gmra.mxu0 %v437
    %v571 = vpop.f32.mrf.mxu0
    %v572 = vadd.f32 %v549, %v571
    %573 = vmatmul.f32.gmra.mxu0 %v440
    %v574 = vpop.f32.mrf.mxu0
    %v575 = vadd.f32 %v549, %v574
    %576 = vmatmul.f32.gmra.mxu0 %v443
    %v577 = vpop.f32.mrf.mxu0
    %v578 = vadd.f32 %v549, %v577
    %579 = vmatmul.f32.gmra.mxu0 %v446
    %v580 = vpop.f32.mrf.mxu0
    %v581 = vadd.f32 %v549, %v580
    %582 = vmatmul.f32.gmra.mxu0 %v449
    %v583 = vpop.f32.mrf.mxu0
    %v584 = vadd.f32 %v549, %v583
    %585 = vmatmul.f32.gmra.mxu0 %v452
    %v586 = vpop.f32.mrf.mxu0
    %v587 = vadd.f32 %v549, %v586
    %588 = vmatmul.f32.gmra.mxu0 %v455
    %v589 = vpop.f32.mrf.mxu0
    %v590 = vadd.f32 %v549, %v589
    %591 = vmatmul.f32.gmra.mxu0 %v458
    %v592 = vpop.f32.mrf.mxu0
    %v593 = vadd.f32 %v549, %v592
    %594 = vmatmul.f32.gmra.mxu0 %v461
    %v595 = vpop.f32.mrf.mxu0
    %v596 = vadd.f32 %v549, %v595
    %597 = vmatmul.f32.gmra.mxu0 %v464
    %v598 = vpop.f32.mrf.mxu0
    %v599 = vadd.f32 %v549, %v598
    %600 = vmatmul.f32.gmra.mxu0 %v467
    %v601 = vpop.f32.mrf.mxu0
    %v602 = vadd.f32 %v549, %v601
    %603 = vmatmul.f32.gmra.mxu0 %v470
    %v604 = vpop.f32.mrf.mxu0
    %v605 = vadd.f32 %v549, %v604
    %606 = vmatmul.f32.gmra.mxu0 %v473
    %v607 = vpop.f32.mrf.mxu0
    %v608 = vadd.f32 %v549, %v607
    %609 = vmatmul.f32.gmra.mxu0 %v476
    %v610 = vpop.f32.mrf.mxu0
    %v611 = vadd.f32 %v549, %v610
    %612 = vmatmul.f32.gmra.mxu0 %v479
    %v613 = vpop.f32.mrf.mxu0
    %v614 = vadd.f32 %v549, %v613
    %615 = vmatmul.f32.gmra.mxu0 %v482
    %v616 = vpop.f32.mrf.mxu0
    %v617 = vadd.f32 %v549, %v616
    %618 = vmatmul.f32.gmra.mxu0 %v485
    %v619 = vpop.f32.mrf.mxu0
    %v620 = vadd.f32 %v549, %v619
    %621 = vmatmul.f32.gmra.mxu0 %v488
    %v622 = vpop.f32.mrf.mxu0
    %v623 = vadd.f32 %v549, %v622
    %624 = vmatmul.f32.gmra.mxu0 %v491
    %v625 = vpop.f32.mrf.mxu0
    %v626 = vadd.f32 %v549, %v625
    %627 = vmatmul.f32.gmra.mxu0 %v494
    %v628 = vpop.f32.mrf.mxu0
    %v629 = vadd.f32 %v549, %v628
    %630 = vmatmul.f32.gmra.mxu0 %v497
    %v631 = vpop.f32.mrf.mxu0
    %v632 = vadd.f32 %v549, %v631
    %633 = vmatmul.f32.gmra.mxu0 %v500
    %v634 = vpop.f32.mrf.mxu0
    %v635 = vadd.f32 %v549, %v634
    %636 = vmatmul.f32.gmra.mxu0 %v503
    %v637 = vpop.f32.mrf.mxu0
    %v638 = vadd.f32 %v549, %v637
    %639 = vmatmul.f32.gmra.mxu0 %v506
    %v640 = vpop.f32.mrf.mxu0
    %v641 = vadd.f32 %v549, %v640
    %642 = vmatmul.f32.gmra.mxu0 %v509
    %v643 = vpop.f32.mrf.mxu0
    %v644 = vadd.f32 %v549, %v643
    %645 = vmatmul.f32.gmra.mxu0 %v512
    %v646 = vpop.f32.mrf.mxu0
    %v647 = vadd.f32 %v549, %v646
    %648 = vmatmul.f32.gmra.mxu0 %v515
    %v649 = vpop.f32.mrf.mxu0
    %v650 = vadd.f32 %v549, %v649
    %651 = vmatmul.f32.gmra.mxu0 %v518
    %v652 = vpop.f32.mrf.mxu0
    %v653 = vadd.f32 %v549, %v652
    %654 = vmatmul.f32.gmra.mxu0 %v521
    %v655 = vpop.f32.mrf.mxu0
    %v656 = vadd.f32 %v549, %v655
    %657 = vmatmul.f32.gmra.mxu0 %v524
    %v658 = vpop.f32.mrf.mxu0
    %v659 = vadd.f32 %v549, %v658
    %660 = vmatmul.f32.gmra.mxu0 %v527
    %v661 = vpop.f32.mrf.mxu0
    %v662 = vadd.f32 %v549, %v661
    %663 = vdwg.mxu0
    %v664 = vmul.f32 %v569, 0.5
    %v665 = vmul.f32 %v572, 0.5
    %v666 = vmul.f32 %v575, 0.5
    %v667 = vmul.f32 %v578, 0.5
    %v668 = vmul.f32 %v581, 0.5
    %v669 = vmul.f32 %v584, 0.5
    %v670 = vmul.f32 %v587, 0.5
    %v671 = vmul.f32 %v590, 0.5
    %v672 = vmul.f32 %v593, 0.5
    %v673 = vmul.f32 %v596, 0.5
    %v674 = vmul.f32 %v599, 0.5
    %v675 = vmul.f32 %v602, 0.5
    %v676 = vmul.f32 %v605, 0.5
    %v677 = vmul.f32 %v608, 0.5
    %v678 = vmul.f32 %v611, 0.5
    %v679 = vmul.f32 %v614, 0.5
    %v680 = vmul.f32 %v617, 0.5
    %v681 = vmul.f32 %v620, 0.5
    %v682 = vmul.f32 %v623, 0.5
    %v683 = vmul.f32 %v626, 0.5
    %v684 = vmul.f32 %v629, 0.5
    %v685 = vmul.f32 %v632, 0.5
    %v686 = vmul.f32 %v635, 0.5
    %v687 = vmul.f32 %v638, 0.5
    %v688 = vmul.f32 %v641, 0.5
    %v689 = vmul.f32 %v644, 0.5
    %v690 = vmul.f32 %v647, 0.5
    %v691 = vmul.f32 %v650, 0.5
    %v692 = vmul.f32 %v653, 0.5
    %v693 = vmul.f32 %v656, 0.5
    %v694 = vmul.f32 %v659, 0.5
    %v695 = vmul.f32 %v662, 0.5
    %v696 = vtanh.pop %v664
    %v697 = vtanh.pop %v665
    %v698 = vtanh.pop %v666
    %v699 = vtanh.pop %v667
    %v700 = vtanh.pop %v668
    %v701 = vtanh.pop %v669
    %v702 = vtanh.pop %v670
    %v703 = vtanh.pop %v671
    %v704 = vtanh.pop %v672
    %v705 = vtanh.pop %v673
    %v706 = vtanh.pop %v674
    %v707 = vtanh.pop %v675
    %v708 = vtanh.pop %v676
    %v709 = vtanh.pop %v677
    %v710 = vtanh.pop %v678
    %v711 = vtanh.pop %v679
    %v712 = vtanh.pop %v680
    %v713 = vtanh.pop %v681
    %v714 = vtanh.pop %v682
    %v715 = vtanh.pop %v683
    %v716 = vtanh.pop %v684
    %v717 = vtanh.pop %v685
    %v718 = vtanh.pop %v686
    %v719 = vtanh.pop %v687
    %v720 = vtanh.pop %v688
    %v721 = vtanh.pop %v689
    %v722 = vtanh.pop %v690
    %v723 = vtanh.pop %v691
    %v724 = vtanh.pop %v692
    %v725 = vtanh.pop %v693
    %v726 = vtanh.pop %v694
    %v727 = vtanh.pop %v695
    %v728 = vadd.f32 %v696, 1.0
    %v729 = vadd.f32 %v697, 1.0
    %v730 = vadd.f32 %v698, 1.0
    %v731 = vadd.f32 %v699, 1.0
    %v732 = vadd.f32 %v700, 1.0
    %v733 = vadd.f32 %v701, 1.0
    %v734 = vadd.f32 %v702, 1.0
    %v735 = vadd.f32 %v703, 1.0
    %v736 = vadd.f32 %v704, 1.0
    %v737 = vadd.f32 %v705, 1.0
    %v738 = vadd.f32 %v706, 1.0
    %v739 = vadd.f32 %v707, 1.0
    %v740 = vadd.f32 %v708, 1.0
    %v741 = vadd.f32 %v709, 1.0
    %v742 = vadd.f32 %v710, 1.0
    %v743 = vadd.f32 %v711, 1.0
    %v744 = vadd.f32 %v712, 1.0
    %v745 = vadd.f32 %v713, 1.0
    %v746 = vadd.f32 %v714, 1.0
    %v747 = vadd.f32 %v715, 1.0
    %v748 = vadd.f32 %v716, 1.0
    %v749 = vadd.f32 %v717, 1.0
    %v750 = vadd.f32 %v718, 1.0
    %v751 = vadd.f32 %v719, 1.0
    %v752 = vadd.f32 %v720, 1.0
    %v753 = vadd.f32 %v721, 1.0
    %v754 = vadd.f32 %v722, 1.0
    %v755 = vadd.f32 %v723, 1.0
    %v756 = vadd.f32 %v724, 1.0
    %v757 = vadd.f32 %v725, 1.0
    %v758 = vadd.f32 %v726, 1.0
    %v759 = vadd.f32 %v727, 1.0
    %v760 = vmul.f32 %v728, 0.5
    %v761 = vmul.f32 %v729, 0.5
    %v762 = vmul.f32 %v730, 0.5
    %v763 = vmul.f32 %v731, 0.5
    %v764 = vmul.f32 %v732, 0.5
    %v765 = vmul.f32 %v733, 0.5
    %v766 = vmul.f32 %v734, 0.5
    %v767 = vmul.f32 %v735, 0.5
    %v768 = vmul.f32 %v736, 0.5
    %v769 = vmul.f32 %v737, 0.5
    %v770 = vmul.f32 %v738, 0.5
    %v771 = vmul.f32 %v739, 0.5
    %v772 = vmul.f32 %v740, 0.5
    %v773 = vmul.f32 %v741, 0.5
    %v774 = vmul.f32 %v742, 0.5
    %v775 = vmul.f32 %v743, 0.5
    %v776 = vmul.f32 %v744, 0.5
    %v777 = vmul.f32 %v745, 0.5
    %v778 = vmul.f32 %v746, 0.5
    %v779 = vmul.f32 %v747, 0.5
    %v780 = vmul.f32 %v748, 0.5
    %v781 = vmul.f32 %v749, 0.5
    %v782 = vmul.f32 %v750, 0.5
    %v783 = vmul.f32 %v751, 0.5
    %v784 = vmul.f32 %v752, 0.5
    %v785 = vmul.f32 %v753, 0.5
    %v786 = vmul.f32 %v754, 0.5
    %v787 = vmul.f32 %v755, 0.5
    %v788 = vmul.f32 %v756, 0.5
    %v789 = vmul.f32 %v757, 0.5
    %v790 = vmul.f32 %v758, 0.5
    %v791 = vmul.f32 %v759, 0.5
    %s792 = scalar_lea.vmem [#allocation5], 512
    %v793 = vld [vmem:[%s792] sm:$0xff]
    %v794 = vld [vmem:[%s792 + $0x8] sm:$0xff]
    %v795 = vld [vmem:[%s792 + $0x10] sm:$0xff]
    %v796 = vld [vmem:[%s792 + $0x18] sm:$0xff]
    %v797 = vld [vmem:[%s792 + $0x20] sm:$0xff]
    %v798 = vld [vmem:[%s792 + $0x28] sm:$0xff]
    %v799 = vld [vmem:[%s792 + $0x30] sm:$0xff]
    %v800 = vld [vmem:[%s792 + $0x38] sm:$0xff]
    %v801 = vld [vmem:[%s792 + $0x40] sm:$0xff]
    %v802 = vld [vmem:[%s792 + $0x48] sm:$0xff]
    %v803 = vld [vmem:[%s792 + $0x50] sm:$0xff]
    %v804 = vld [vmem:[%s792 + $0x58] sm:$0xff]
    %v805 = vld [vmem:[%s792 + $0x60] sm:$0xff]
    %v806 = vld [vmem:[%s792 + $0x68] sm:$0xff]
    %v807 = vld [vmem:[%s792 + $0x70] sm:$0xff]
    %v808 = vld [vmem:[%s792 + $0x78] sm:$0xff]
    %s809 = scalar_lea.vmem [#allocation7], 4
    %v810 = vld [vmem:[%s809] sm:$0x1]
    %v812 = vperm.slane %v810, 0
    %814 = vmatpush.msra.mxu0 %v808
    %815 = vmatpush.msra.mxu0 %v807
    %816 = vmatpush.msra.mxu0 %v806
    %817 = vmatpush.msra.mxu0 %v805
    %818 = vmatpush.msra.mxu0 %v804
    %819 = vmatpush.msra.mxu0 %v803
    %820 = vmatpush.msra.mxu0 %v802
    %821 = vmatpush.msra.mxu0 %v801
    %822 = vmatpush.msra.mxu0 %v800
    %823 = vmatpush.msra.mxu0 %v799
    %824 = vmatpush.msra.mxu0 %v798
    %825 = vmatpush.msra.mxu0 %v797
    %826 = vmatpush.msra.mxu0 %v796
    %827 = vmatpush.msra.mxu0 %v795
    %828 = vmatpush.msra.mxu0 %v794
    %829 = vmatpush.msra.mxu0 %v793
    %830 = vmatmul.f32.gmra.mxu0 %v760
    %v831 = vpop.f32.mrf.mxu0
    %v832 = vadd.f32 %v812, %v831
    %833 = vmatmul.f32.gmra.mxu0 %v761
    %v834 = vpop.f32.mrf.mxu0
    %v835 = vadd.f32 %v812, %v834
    %836 = vmatmul.f32.gmra.mxu0 %v762
    %v837 = vpop.f32.mrf.mxu0
    %v838 = vadd.f32 %v812, %v837
    %839 = vmatmul.f32.gmra.mxu0 %v763
    %v840 = vpop.f32.mrf.mxu0
    %v841 = vadd.f32 %v812, %v840
    %842 = vmatmul.f32.gmra.mxu0 %v764
    %v843 = vpop.f32.mrf.mxu0
    %v844 = vadd.f32 %v812, %v843
    %845 = vmatmul.f32.gmra.mxu0 %v765
    %v846 = vpop.f32.mrf.mxu0
    %v847 = vadd.f32 %v812, %v846
    %848 = vmatmul.f32.gmra.mxu0 %v766
    %v849 = vpop.f32.mrf.mxu0
    %v850 = vadd.f32 %v812, %v849
    %851 = vmatmul.f32.gmra.mxu0 %v767
    %v852 = vpop.f32.mrf.mxu0
    %v853 = vadd.f32 %v812, %v852
    %854 = vmatmul.f32.gmra.mxu0 %v768
    %v855 = vpop.f32.mrf.mxu0
    %v856 = vadd.f32 %v812, %v855
    %857 = vmatmul.f32.gmra.mxu0 %v769
    %v858 = vpop.f32.mrf.mxu0
    %v859 = vadd.f32 %v812, %v858
    %860 = vmatmul.f32.gmra.mxu0 %v770
    %v861 = vpop.f32.mrf.mxu0
    %v862 = vadd.f32 %v812, %v861
    %863 = vmatmul.f32.gmra.mxu0 %v771
    %v864 = vpop.f32.mrf.mxu0
    %v865 = vadd.f32 %v812, %v864
    %866 = vmatmul.f32.gmra.mxu0 %v772
    %v867 = vpop.f32.mrf.mxu0
    %v868 = vadd.f32 %v812, %v867
    %869 = vmatmul.f32.gmra.mxu0 %v773
    %v870 = vpop.f32.mrf.mxu0
    %v871 = vadd.f32 %v812, %v870
    %872 = vmatmul.f32.gmra.mxu0 %v774
    %v873 = vpop.f32.mrf.mxu0
    %v874 = vadd.f32 %v812, %v873
    %875 = vmatmul.f32.gmra.mxu0 %v775
    %v876 = vpop.f32.mrf.mxu0
    %v877 = vadd.f32 %v812, %v876
    %878 = vmatmul.f32.gmra.mxu0 %v776
    %v879 = vpop.f32.mrf.mxu0
    %v880 = vadd.f32 %v812, %v879
    %881 = vmatmul.f32.gmra.mxu0 %v777
    %v882 = vpop.f32.mrf.mxu0
    %v883 = vadd.f32 %v812, %v882
    %884 = vmatmul.f32.gmra.mxu0 %v778
    %v885 = vpop.f32.mrf.mxu0
    %v886 = vadd.f32 %v812, %v885
    %887 = vmatmul.f32.gmra.mxu0 %v779
    %v888 = vpop.f32.mrf.mxu0
    %v889 = vadd.f32 %v812, %v888
    %890 = vmatmul.f32.gmra.mxu0 %v780
    %v891 = vpop.f32.mrf.mxu0
    %v892 = vadd.f32 %v812, %v891
    %893 = vmatmul.f32.gmra.mxu0 %v781
    %v894 = vpop.f32.mrf.mxu0
    %v895 = vadd.f32 %v812, %v894
    %896 = vmatmul.f32.gmra.mxu0 %v782
    %v897 = vpop.f32.mrf.mxu0
    %v898 = vadd.f32 %v812, %v897
    %899 = vmatmul.f32.gmra.mxu0 %v783
    %v900 = vpop.f32.mrf.mxu0
    %v901 = vadd.f32 %v812, %v900
    %902 = vmatmul.f32.gmra.mxu0 %v784
    %v903 = vpop.f32.mrf.mxu0
    %v904 = vadd.f32 %v812, %v903
    %905 = vmatmul.f32.gmra.mxu0 %v785
    %v906 = vpop.f32.mrf.mxu0
    %v907 = vadd.f32 %v812, %v906
    %908 = vmatmul.f32.gmra.mxu0 %v786
    %v909 = vpop.f32.mrf.mxu0
    %v910 = vadd.f32 %v812, %v909
    %911 = vmatmul.f32.gmra.mxu0 %v787
    %v912 = vpop.f32.mrf.mxu0
    %v913 = vadd.f32 %v812, %v912
    %914 = vmatmul.f32.gmra.mxu0 %v788
    %v915 = vpop.f32.mrf.mxu0
    %v916 = vadd.f32 %v812, %v915
    %917 = vmatmul.f32.gmra.mxu0 %v789
    %v918 = vpop.f32.mrf.mxu0
    %v919 = vadd.f32 %v812, %v918
    %920 = vmatmul.f32.gmra.mxu0 %v790
    %v921 = vpop.f32.mrf.mxu0
    %v922 = vadd.f32 %v812, %v921
    %923 = vmatmul.f32.gmra.mxu0 %v791
    %v924 = vpop.f32.mrf.mxu0
    %v925 = vadd.f32 %v812, %v924
    %926 = vdwg.mxu0
    %s927 = scalar_lea.vmem [#allocation5], 640
    %v928 = vld [vmem:[%s927] sm:$0xff]
    %v929 = vld [vmem:[%s927 + $0x8] sm:$0xff]
    %v930 = vld [vmem:[%s927 + $0x10] sm:$0xff]
    %v931 = vld [vmem:[%s927 + $0x18] sm:$0xff]
    %v932 = vld [vmem:[%s927 + $0x20] sm:$0xff]
    %v933 = vld [vmem:[%s927 + $0x28] sm:$0xff]
    %v934 = vld [vmem:[%s927 + $0x30] sm:$0xff]
    %v935 = vld [vmem:[%s927 + $0x38] sm:$0xff]
    %v936 = vld [vmem:[%s927 + $0x40] sm:$0xff]
    %v937 = vld [vmem:[%s927 + $0x48] sm:$0xff]
    %v938 = vld [vmem:[%s927 + $0x50] sm:$0xff]
    %v939 = vld [vmem:[%s927 + $0x58] sm:$0xff]
    %v940 = vld [vmem:[%s927 + $0x60] sm:$0xff]
    %v941 = vld [vmem:[%s927 + $0x68] sm:$0xff]
    %v942 = vld [vmem:[%s927 + $0x70] sm:$0xff]
    %v943 = vld [vmem:[%s927 + $0x78] sm:$0xff]
    %s944 = scalar_lea.vmem [#allocation7], 5
    %v945 = vld [vmem:[%s944] sm:$0x1]
    %v947 = vperm.slane %v945, 0
    %949 = vmatpush.msra.mxu0 %v943
    %950 = vmatpush.msra.mxu0 %v942
    %951 = vmatpush.msra.mxu0 %v941
    %952 = vmatpush.msra.mxu0 %v940
    %953 = vmatpush.msra.mxu0 %v939
    %954 = vmatpush.msra.mxu0 %v938
    %955 = vmatpush.msra.mxu0 %v937
    %956 = vmatpush.msra.mxu0 %v936
    %957 = vmatpush.msra.mxu0 %v935
    %958 = vmatpush.msra.mxu0 %v934
    %959 = vmatpush.msra.mxu0 %v933
    %960 = vmatpush.msra.mxu0 %v932
    %961 = vmatpush.msra.mxu0 %v931
    %962 = vmatpush.msra.mxu0 %v930
    %963 = vmatpush.msra.mxu0 %v929
    %964 = vmatpush.msra.mxu0 %v928
    %965 = vmatmul.f32.gmra.mxu0 %v832
    %v966 = vpop.f32.mrf.mxu0
    %v967 = vadd.f32 %v947, %v966
    %968 = vmatmul.f32.gmra.mxu0 %v835
    %v969 = vpop.f32.mrf.mxu0
    %v970 = vadd.f32 %v947, %v969
    %971 = vmatmul.f32.gmra.mxu0 %v838
    %v972 = vpop.f32.mrf.mxu0
    %v973 = vadd.f32 %v947, %v972
    %974 = vmatmul.f32.gmra.mxu0 %v841
    %v975 = vpop.f32.mrf.mxu0
    %v976 = vadd.f32 %v947, %v975
    %977 = vmatmul.f32.gmra.mxu0 %v844
    %v978 = vpop.f32.mrf.mxu0
    %v979 = vadd.f32 %v947, %v978
    %980 = vmatmul.f32.gmra.mxu0 %v847
    %v981 = vpop.f32.mrf.mxu0
    %v982 = vadd.f32 %v947, %v981
    %983 = vmatmul.f32.gmra.mxu0 %v850
    %v984 = vpop.f32.mrf.mxu0
    %v985 = vadd.f32 %v947, %v984
    %986 = vmatmul.f32.gmra.mxu0 %v853
    %v987 = vpop.f32.mrf.mxu0
    %v988 = vadd.f32 %v947, %v987
    %989 = vmatmul.f32.gmra.mxu0 %v856
    %v990 = vpop.f32.mrf.mxu0
    %v991 = vadd.f32 %v947, %v990
    %992 = vmatmul.f32.gmra.mxu0 %v859
    %v993 = vpop.f32.mrf.mxu0
    %v994 = vadd.f32 %v947, %v993
    %995 = vmatmul.f32.gmra.mxu0 %v862
    %v996 = vpop.f32.mrf.mxu0
    %v997 = vadd.f32 %v947, %v996
    %998 = vmatmul.f32.gmra.mxu0 %v865
    %v999 = vpop.f32.mrf.mxu0
    %v1000 = vadd.f32 %v947, %v999
    %1001 = vmatmul.f32.gmra.mxu0 %v868
    %v1002 = vpop.f32.mrf.mxu0
    %v1003 = vadd.f32 %v947, %v1002
    %1004 = vmatmul.f32.gmra.mxu0 %v871
    %v1005 = vpop.f32.mrf.mxu0
    %v1006 = vadd.f32 %v947, %v1005
    %1007 = vmatmul.f32.gmra.mxu0 %v874
    %v1008 = vpop.f32.mrf.mxu0
    %v1009 = vadd.f32 %v947, %v1008
    %1010 = vmatmul.f32.gmra.mxu0 %v877
    %v1011 = vpop.f32.mrf.mxu0
    %v1012 = vadd.f32 %v947, %v1011
    %1013 = vmatmul.f32.gmra.mxu0 %v880
    %v1014 = vpop.f32.mrf.mxu0
    %v1015 = vadd.f32 %v947, %v1014
    %1016 = vmatmul.f32.gmra.mxu0 %v883
    %v1017 = vpop.f32.mrf.mxu0
    %v1018 = vadd.f32 %v947, %v1017
    %1019 = vmatmul.f32.gmra.mxu0 %v886
    %v1020 = vpop.f32.mrf.mxu0
    %v1021 = vadd.f32 %v947, %v1020
    %1022 = vmatmul.f32.gmra.mxu0 %v889
    %v1023 = vpop.f32.mrf.mxu0
    %v1024 = vadd.f32 %v947, %v1023
    %1025 = vmatmul.f32.gmra.mxu0 %v892
    %v1026 = vpop.f32.mrf.mxu0
    %v1027 = vadd.f32 %v947, %v1026
    %1028 = vmatmul.f32.gmra.mxu0 %v895
    %v1029 = vpop.f32.mrf.mxu0
    %v1030 = vadd.f32 %v947, %v1029
    %1031 = vmatmul.f32.gmra.mxu0 %v898
    %v1032 = vpop.f32.mrf.mxu0
    %v1033 = vadd.f32 %v947, %v1032
    %1034 = vmatmul.f32.gmra.mxu0 %v901
    %v1035 = vpop.f32.mrf.mxu0
    %v1036 = vadd.f32 %v947, %v1035
    %1037 = vmatmul.f32.gmra.mxu0 %v904
    %v1038 = vpop.f32.mrf.mxu0
    %v1039 = vadd.f32 %v947, %v1038
    %1040 = vmatmul.f32.gmra.mxu0 %v907
    %v1041 = vpop.f32.mrf.mxu0
    %v1042 = vadd.f32 %v947, %v1041
    %1043 = vmatmul.f32.gmra.mxu0 %v910
    %v1044 = vpop.f32.mrf.mxu0
    %v1045 = vadd.f32 %v947, %v1044
    %1046 = vmatmul.f32.gmra.mxu0 %v913
    %v1047 = vpop.f32.mrf.mxu0
    %v1048 = vadd.f32 %v947, %v1047
    %1049 = vmatmul.f32.gmra.mxu0 %v916
    %v1050 = vpop.f32.mrf.mxu0
    %v1051 = vadd.f32 %v947, %v1050
    %1052 = vmatmul.f32.gmra.mxu0 %v919
    %v1053 = vpop.f32.mrf.mxu0
    %v1054 = vadd.f32 %v947, %v1053
    %1055 = vmatmul.f32.gmra.mxu0 %v922
    %v1056 = vpop.f32.mrf.mxu0
    %v1057 = vadd.f32 %v947, %v1056
    %1058 = vmatmul.f32.gmra.mxu0 %v925
    %v1059 = vpop.f32.mrf.mxu0
    %v1060 = vadd.f32 %v947, %v1059
    %1061 = vdwg.mxu0
    %s1062 = scalar_lea.vmem [#allocation5], 768
    %v1063 = vld [vmem:[%s1062] sm:$0xff]
    %v1064 = vld [vmem:[%s1062 + $0x8] sm:$0xff]
    %v1065 = vld [vmem:[%s1062 + $0x10] sm:$0xff]
    %v1066 = vld [vmem:[%s1062 + $0x18] sm:$0xff]
    %v1067 = vld [vmem:[%s1062 + $0x20] sm:$0xff]
    %v1068 = vld [vmem:[%s1062 + $0x28] sm:$0xff]
    %v1069 = vld [vmem:[%s1062 + $0x30] sm:$0xff]
    %v1070 = vld [vmem:[%s1062 + $0x38] sm:$0xff]
    %v1071 = vld [vmem:[%s1062 + $0x40] sm:$0xff]
    %v1072 = vld [vmem:[%s1062 + $0x48] sm:$0xff]
    %v1073 = vld [vmem:[%s1062 + $0x50] sm:$0xff]
    %v1074 = vld [vmem:[%s1062 + $0x58] sm:$0xff]
    %v1075 = vld [vmem:[%s1062 + $0x60] sm:$0xff]
    %v1076 = vld [vmem:[%s1062 + $0x68] sm:$0xff]
    %v1077 = vld [vmem:[%s1062 + $0x70] sm:$0xff]
    %v1078 = vld [vmem:[%s1062 + $0x78] sm:$0xff]
    %s1079 = scalar_lea.vmem [#allocation7], 6
    %v1080 = vld [vmem:[%s1079] sm:$0x1]
    %v1082 = vperm.slane %v1080, 0
    %1084 = vmatpush.msra.mxu0 %v1078
    %1085 = vmatpush.msra.mxu0 %v1077
    %1086 = vmatpush.msra.mxu0 %v1076
    %1087 = vmatpush.msra.mxu0 %v1075
    %1088 = vmatpush.msra.mxu0 %v1074
    %1089 = vmatpush.msra.mxu0 %v1073
    %1090 = vmatpush.msra.mxu0 %v1072
    %1091 = vmatpush.msra.mxu0 %v1071
    %1092 = vmatpush.msra.mxu0 %v1070
    %1093 = vmatpush.msra.mxu0 %v1069
    %1094 = vmatpush.msra.mxu0 %v1068
    %1095 = vmatpush.msra.mxu0 %v1067
    %1096 = vmatpush.msra.mxu0 %v1066
    %1097 = vmatpush.msra.mxu0 %v1065
    %1098 = vmatpush.msra.mxu0 %v1064
    %1099 = vmatpush.msra.mxu0 %v1063
    %1100 = vmatmul.f32.gmra.mxu0 %v967
    %v1101 = vpop.f32.mrf.mxu0
    %v1102 = vadd.f32 %v1082, %v1101
    %1103 = vmatmul.f32.gmra.mxu0 %v970
    %v1104 = vpop.f32.mrf.mxu0
    %v1105 = vadd.f32 %v1082, %v1104
    %1106 = vmatmul.f32.gmra.mxu0 %v973
    %v1107 = vpop.f32.mrf.mxu0
    %v1108 = vadd.f32 %v1082, %v1107
    %1109 = vmatmul.f32.gmra.mxu0 %v976
    %v1110 = vpop.f32.mrf.mxu0
    %v1111 = vadd.f32 %v1082, %v1110
    %1112 = vmatmul.f32.gmra.mxu0 %v979
    %v1113 = vpop.f32.mrf.mxu0
    %v1114 = vadd.f32 %v1082, %v1113
    %1115 = vmatmul.f32.gmra.mxu0 %v982
    %v1116 = vpop.f32.mrf.mxu0
    %v1117 = vadd.f32 %v1082, %v1116
    %1118 = vmatmul.f32.gmra.mxu0 %v985
    %v1119 = vpop.f32.mrf.mxu0
    %v1120 = vadd.f32 %v1082, %v1119
    %1121 = vmatmul.f32.gmra.mxu0 %v988
    %v1122 = vpop.f32.mrf.mxu0
    %v1123 = vadd.f32 %v1082, %v1122
    %1124 = vmatmul.f32.gmra.mxu0 %v991
    %v1125 = vpop.f32.mrf.mxu0
    %v1126 = vadd.f32 %v1082, %v1125
    %1127 = vmatmul.f32.gmra.mxu0 %v994
    %v1128 = vpop.f32.mrf.mxu0
    %v1129 = vadd.f32 %v1082, %v1128
    %1130 = vmatmul.f32.gmra.mxu0 %v997
    %v1131 = vpop.f32.mrf.mxu0
    %v1132 = vadd.f32 %v1082, %v1131
    %1133 = vmatmul.f32.gmra.mxu0 %v1000
    %v1134 = vpop.f32.mrf.mxu0
    %v1135 = vadd.f32 %v1082, %v1134
    %1136 = vmatmul.f32.gmra.mxu0 %v1003
    %v1137 = vpop.f32.mrf.mxu0
    %v1138 = vadd.f32 %v1082, %v1137
    %1139 = vmatmul.f32.gmra.mxu0 %v1006
    %v1140 = vpop.f32.mrf.mxu0
    %v1141 = vadd.f32 %v1082, %v1140
    %1142 = vmatmul.f32.gmra.mxu0 %v1009
    %v1143 = vpop.f32.mrf.mxu0
    %v1144 = vadd.f32 %v1082, %v1143
    %1145 = vmatmul.f32.gmra.mxu0 %v1012
    %v1146 = vpop.f32.mrf.mxu0
    %v1147 = vadd.f32 %v1082, %v1146
    %1148 = vmatmul.f32.gmra.mxu0 %v1015
    %v1149 = vpop.f32.mrf.mxu0
    %v1150 = vadd.f32 %v1082, %v1149
    %1151 = vmatmul.f32.gmra.mxu0 %v1018
    %v1152 = vpop.f32.mrf.mxu0
    %v1153 = vadd.f32 %v1082, %v1152
    %1154 = vmatmul.f32.gmra.mxu0 %v1021
    %v1155 = vpop.f32.mrf.mxu0
    %v1156 = vadd.f32 %v1082, %v1155
    %1157 = vmatmul.f32.gmra.mxu0 %v1024
    %v1158 = vpop.f32.mrf.mxu0
    %v1159 = vadd.f32 %v1082, %v1158
    %1160 = vmatmul.f32.gmra.mxu0 %v1027
    %v1161 = vpop.f32.mrf.mxu0
    %v1162 = vadd.f32 %v1082, %v1161
    %1163 = vmatmul.f32.gmra.mxu0 %v1030
    %v1164 = vpop.f32.mrf.mxu0
    %v1165 = vadd.f32 %v1082, %v1164
    %1166 = vmatmul.f32.gmra.mxu0 %v1033
    %v1167 = vpop.f32.mrf.mxu0
    %v1168 = vadd.f32 %v1082, %v1167
    %1169 = vmatmul.f32.gmra.mxu0 %v1036
    %v1170 = vpop.f32.mrf.mxu0
    %v1171 = vadd.f32 %v1082, %v1170
    %1172 = vmatmul.f32.gmra.mxu0 %v1039
    %v1173 = vpop.f32.mrf.mxu0
    %v1174 = vadd.f32 %v1082, %v1173
    %1175 = vmatmul.f32.gmra.mxu0 %v1042
    %v1176 = vpop.f32.mrf.mxu0
    %v1177 = vadd.f32 %v1082, %v1176
    %1178 = vmatmul.f32.gmra.mxu0 %v1045
    %v1179 = vpop.f32.mrf.mxu0
    %v1180 = vadd.f32 %v1082, %v1179
    %1181 = vmatmul.f32.gmra.mxu0 %v1048
    %v1182 = vpop.f32.mrf.mxu0
    %v1183 = vadd.f32 %v1082, %v1182
    %1184 = vmatmul.f32.gmra.mxu0 %v1051
    %v1185 = vpop.f32.mrf.mxu0
    %v1186 = vadd.f32 %v1082, %v1185
    %1187 = vmatmul.f32.gmra.mxu0 %v1054
    %v1188 = vpop.f32.mrf.mxu0
    %v1189 = vadd.f32 %v1082, %v1188
    %1190 = vmatmul.f32.gmra.mxu0 %v1057
    %v1191 = vpop.f32.mrf.mxu0
    %v1192 = vadd.f32 %v1082, %v1191
    %1193 = vmatmul.f32.gmra.mxu0 %v1060
    %v1194 = vpop.f32.mrf.mxu0
    %v1195 = vadd.f32 %v1082, %v1194
    %1196 = vdwg.mxu0
    %s1197 = scalar_lea.vmem [#allocation5], 896
    %v1198 = vld [vmem:[%s1197] sm:$0xff]
    %v1199 = vld [vmem:[%s1197 + $0x8] sm:$0xff]
    %v1200 = vld [vmem:[%s1197 + $0x10] sm:$0xff]
    %v1201 = vld [vmem:[%s1197 + $0x18] sm:$0xff]
    %v1202 = vld [vmem:[%s1197 + $0x20] sm:$0xff]
    %v1203 = vld [vmem:[%s1197 + $0x28] sm:$0xff]
    %v1204 = vld [vmem:[%s1197 + $0x30] sm:$0xff]
    %v1205 = vld [vmem:[%s1197 + $0x38] sm:$0xff]
    %v1206 = vld [vmem:[%s1197 + $0x40] sm:$0xff]
    %v1207 = vld [vmem:[%s1197 + $0x48] sm:$0xff]
    %v1208 = vld [vmem:[%s1197 + $0x50] sm:$0xff]
    %v1209 = vld [vmem:[%s1197 + $0x58] sm:$0xff]
    %v1210 = vld [vmem:[%s1197 + $0x60] sm:$0xff]
    %v1211 = vld [vmem:[%s1197 + $0x68] sm:$0xff]
    %v1212 = vld [vmem:[%s1197 + $0x70] sm:$0xff]
    %v1213 = vld [vmem:[%s1197 + $0x78] sm:$0xff]
    %s1214 = scalar_lea.vmem [#allocation7], 7
    %v1215 = vld [vmem:[%s1214] sm:$0x1]
    %v1217 = vperm.slane %v1215, 0
    %1219 = vmatpush.msra.mxu0 %v1213
    %1220 = vmatpush.msra.mxu0 %v1212
    %1221 = vmatpush.msra.mxu0 %v1211
    %1222 = vmatpush.msra.mxu0 %v1210
    %1223 = vmatpush.msra.mxu0 %v1209
    %1224 = vmatpush.msra.mxu0 %v1208
    %1225 = vmatpush.msra.mxu0 %v1207
    %1226 = vmatpush.msra.mxu0 %v1206
    %1227 = vmatpush.msra.mxu0 %v1205
    %1228 = vmatpush.msra.mxu0 %v1204
    %1229 = vmatpush.msra.mxu0 %v1203
    %1230 = vmatpush.msra.mxu0 %v1202
    %1231 = vmatpush.msra.mxu0 %v1201
    %1232 = vmatpush.msra.mxu0 %v1200
    %1233 = vmatpush.msra.mxu0 %v1199
    %1234 = vmatpush.msra.mxu0 %v1198
    %1235 = vmatmul.f32.gmra.mxu0 %v1102
    %v1236 = vpop.f32.mrf.mxu0
    %v1237 = vadd.f32 %v1217, %v1236
    %1238 = vmatmul.f32.gmra.mxu0 %v1105
    %v1239 = vpop.f32.mrf.mxu0
    %v1240 = vadd.f32 %v1217, %v1239
    %1241 = vmatmul.f32.gmra.mxu0 %v1108
    %v1242 = vpop.f32.mrf.mxu0
    %v1243 = vadd.f32 %v1217, %v1242
    %1244 = vmatmul.f32.gmra.mxu0 %v1111
    %v1245 = vpop.f32.mrf.mxu0
    %v1246 = vadd.f32 %v1217, %v1245
    %1247 = vmatmul.f32.gmra.mxu0 %v1114
    %v1248 = vpop.f32.mrf.mxu0
    %v1249 = vadd.f32 %v1217, %v1248
    %1250 = vmatmul.f32.gmra.mxu0 %v1117
    %v1251 = vpop.f32.mrf.mxu0
    %v1252 = vadd.f32 %v1217, %v1251
    %1253 = vmatmul.f32.gmra.mxu0 %v1120
    %v1254 = vpop.f32.mrf.mxu0
    %v1255 = vadd.f32 %v1217, %v1254
    %1256 = vmatmul.f32.gmra.mxu0 %v1123
    %v1257 = vpop.f32.mrf.mxu0
    %v1258 = vadd.f32 %v1217, %v1257
    %1259 = vmatmul.f32.gmra.mxu0 %v1126
    %v1260 = vpop.f32.mrf.mxu0
    %v1261 = vadd.f32 %v1217, %v1260
    %1262 = vmatmul.f32.gmra.mxu0 %v1129
    %v1263 = vpop.f32.mrf.mxu0
    %v1264 = vadd.f32 %v1217, %v1263
    %1265 = vmatmul.f32.gmra.mxu0 %v1132
    %v1266 = vpop.f32.mrf.mxu0
    %v1267 = vadd.f32 %v1217, %v1266
    %1268 = vmatmul.f32.gmra.mxu0 %v1135
    %v1269 = vpop.f32.mrf.mxu0
    %v1270 = vadd.f32 %v1217, %v1269
    %1271 = vmatmul.f32.gmra.mxu0 %v1138
    %v1272 = vpop.f32.mrf.mxu0
    %v1273 = vadd.f32 %v1217, %v1272
    %1274 = vmatmul.f32.gmra.mxu0 %v1141
    %v1275 = vpop.f32.mrf.mxu0
    %v1276 = vadd.f32 %v1217, %v1275
    %1277 = vmatmul.f32.gmra.mxu0 %v1144
    %v1278 = vpop.f32.mrf.mxu0
    %v1279 = vadd.f32 %v1217, %v1278
    %1280 = vmatmul.f32.gmra.mxu0 %v1147
    %v1281 = vpop.f32.mrf.mxu0
    %v1282 = vadd.f32 %v1217, %v1281
    %1283 = vmatmul.f32.gmra.mxu0 %v1150
    %v1284 = vpop.f32.mrf.mxu0
    %v1285 = vadd.f32 %v1217, %v1284
    %1286 = vmatmul.f32.gmra.mxu0 %v1153
    %v1287 = vpop.f32.mrf.mxu0
    %v1288 = vadd.f32 %v1217, %v1287
    %1289 = vmatmul.f32.gmra.mxu0 %v1156
    %v1290 = vpop.f32.mrf.mxu0
    %v1291 = vadd.f32 %v1217, %v1290
    %1292 = vmatmul.f32.gmra.mxu0 %v1159
    %v1293 = vpop.f32.mrf.mxu0
    %v1294 = vadd.f32 %v1217, %v1293
    %1295 = vmatmul.f32.gmra.mxu0 %v1162
    %v1296 = vpop.f32.mrf.mxu0
    %v1297 = vadd.f32 %v1217, %v1296
    %1298 = vmatmul.f32.gmra.mxu0 %v1165
    %v1299 = vpop.f32.mrf.mxu0
    %v1300 = vadd.f32 %v1217, %v1299
    %1301 = vmatmul.f32.gmra.mxu0 %v1168
    %v1302 = vpop.f32.mrf.mxu0
    %v1303 = vadd.f32 %v1217, %v1302
    %1304 = vmatmul.f32.gmra.mxu0 %v1171
    %v1305 = vpop.f32.mrf.mxu0
    %v1306 = vadd.f32 %v1217, %v1305
    %1307 = vmatmul.f32.gmra.mxu0 %v1174
    %v1308 = vpop.f32.mrf.mxu0
    %v1309 = vadd.f32 %v1217, %v1308
    %1310 = vmatmul.f32.gmra.mxu0 %v1177
    %v1311 = vpop.f32.mrf.mxu0
    %v1312 = vadd.f32 %v1217, %v1311
    %1313 = vmatmul.f32.gmra.mxu0 %v1180
    %v1314 = vpop.f32.mrf.mxu0
    %v1315 = vadd.f32 %v1217, %v1314
    %1316 = vmatmul.f32.gmra.mxu0 %v1183
    %v1317 = vpop.f32.mrf.mxu0
    %v1318 = vadd.f32 %v1217, %v1317
    %1319 = vmatmul.f32.gmra.mxu0 %v1186
    %v1320 = vpop.f32.mrf.mxu0
    %v1321 = vadd.f32 %v1217, %v1320
    %1322 = vmatmul.f32.gmra.mxu0 %v1189
    %v1323 = vpop.f32.mrf.mxu0
    %v1324 = vadd.f32 %v1217, %v1323
    %1325 = vmatmul.f32.gmra.mxu0 %v1192
    %v1326 = vpop.f32.mrf.mxu0
    %v1327 = vadd.f32 %v1217, %v1326
    %1328 = vmatmul.f32.gmra.mxu0 %v1195
    %v1329 = vpop.f32.mrf.mxu0
    %v1330 = vadd.f32 %v1217, %v1329
    %1331 = vdwg.mxu0
    %v1332 = vmul.f32 %v1237, 0.5
    %v1333 = vmul.f32 %v1240, 0.5
    %v1334 = vmul.f32 %v1243, 0.5
    %v1335 = vmul.f32 %v1246, 0.5
    %v1336 = vmul.f32 %v1249, 0.5
    %v1337 = vmul.f32 %v1252, 0.5
    %v1338 = vmul.f32 %v1255, 0.5
    %v1339 = vmul.f32 %v1258, 0.5
    %v1340 = vmul.f32 %v1261, 0.5
    %v1341 = vmul.f32 %v1264, 0.5
    %v1342 = vmul.f32 %v1267, 0.5
    %v1343 = vmul.f32 %v1270, 0.5
    %v1344 = vmul.f32 %v1273, 0.5
    %v1345 = vmul.f32 %v1276, 0.5
    %v1346 = vmul.f32 %v1279, 0.5
    %v1347 = vmul.f32 %v1282, 0.5
    %v1348 = vmul.f32 %v1285, 0.5
    %v1349 = vmul.f32 %v1288, 0.5
    %v1350 = vmul.f32 %v1291, 0.5
    %v1351 = vmul.f32 %v1294, 0.5
    %v1352 = vmul.f32 %v1297, 0.5
    %v1353 = vmul.f32 %v1300, 0.5
    %v1354 = vmul.f32 %v1303, 0.5
    %v1355 = vmul.f32 %v1306, 0.5
    %v1356 = vmul.f32 %v1309, 0.5
    %v1357 = vmul.f32 %v1312, 0.5
    %v1358 = vmul.f32 %v1315, 0.5
    %v1359 = vmul.f32 %v1318, 0.5
    %v1360 = vmul.f32 %v1321, 0.5
    %v1361 = vmul.f32 %v1324, 0.5
    %v1362 = vmul.f32 %v1327, 0.5
    %v1363 = vmul.f32 %v1330, 0.5
    %v1364 = vtanh.pop %v1332
    %v1365 = vtanh.pop %v1333
    %v1366 = vtanh.pop %v1334
    %v1367 = vtanh.pop %v1335
    %v1368 = vtanh.pop %v1336
    %v1369 = vtanh.pop %v1337
    %v1370 = vtanh.pop %v1338
    %v1371 = vtanh.pop %v1339
    %v1372 = vtanh.pop %v1340
    %v1373 = vtanh.pop %v1341
    %v1374 = vtanh.pop %v1342
    %v1375 = vtanh.pop %v1343
    %v1376 = vtanh.pop %v1344
    %v1377 = vtanh.pop %v1345
    %v1378 = vtanh.pop %v1346
    %v1379 = vtanh.pop %v1347
    %v1380 = vtanh.pop %v1348
    %v1381 = vtanh.pop %v1349
    %v1382 = vtanh.pop %v1350
    %v1383 = vtanh.pop %v1351
    %v1384 = vtanh.pop %v1352
    %v1385 = vtanh.pop %v1353
    %v1386 = vtanh.pop %v1354
    %v1387 = vtanh.pop %v1355
    %v1388 = vtanh.pop %v1356
    %v1389 = vtanh.pop %v1357
    %v1390 = vtanh.pop %v1358
    %v1391 = vtanh.pop %v1359
    %v1392 = vtanh.pop %v1360
    %v1393 = vtanh.pop %v1361
    %v1394 = vtanh.pop %v1362
    %v1395 = vtanh.pop %v1363
    %v1396 = vadd.f32 %v1364, 1.0
    %v1397 = vadd.f32 %v1365, 1.0
    %v1398 = vadd.f32 %v1366, 1.0
    %v1399 = vadd.f32 %v1367, 1.0
    %v1400 = vadd.f32 %v1368, 1.0
    %v1401 = vadd.f32 %v1369, 1.0
    %v1402 = vadd.f32 %v1370, 1.0
    %v1403 = vadd.f32 %v1371, 1.0
    %v1404 = vadd.f32 %v1372, 1.0
    %v1405 = vadd.f32 %v1373, 1.0
    %v1406 = vadd.f32 %v1374, 1.0
    %v1407 = vadd.f32 %v1375, 1.0
    %v1408 = vadd.f32 %v1376, 1.0
    %v1409 = vadd.f32 %v1377, 1.0
    %v1410 = vadd.f32 %v1378, 1.0
    %v1411 = vadd.f32 %v1379, 1.0
    %v1412 = vadd.f32 %v1380, 1.0
    %v1413 = vadd.f32 %v1381, 1.0
    %v1414 = vadd.f32 %v1382, 1.0
    %v1415 = vadd.f32 %v1383, 1.0
    %v1416 = vadd.f32 %v1384, 1.0
    %v1417 = vadd.f32 %v1385, 1.0
    %v1418 = vadd.f32 %v1386, 1.0
    %v1419 = vadd.f32 %v1387, 1.0
    %v1420 = vadd.f32 %v1388, 1.0
    %v1421 = vadd.f32 %v1389, 1.0
    %v1422 = vadd.f32 %v1390, 1.0
    %v1423 = vadd.f32 %v1391, 1.0
    %v1424 = vadd.f32 %v1392, 1.0
    %v1425 = vadd.f32 %v1393, 1.0
    %v1426 = vadd.f32 %v1394, 1.0
    %v1427 = vadd.f32 %v1395, 1.0
    %v1428 = vmul.f32 %v1396, 0.5
    %v1429 = vmul.f32 %v1397, 0.5
    %v1430 = vmul.f32 %v1398, 0.5
    %v1431 = vmul.f32 %v1399, 0.5
    %v1432 = vmul.f32 %v1400, 0.5
    %v1433 = vmul.f32 %v1401, 0.5
    %v1434 = vmul.f32 %v1402, 0.5
    %v1435 = vmul.f32 %v1403, 0.5
    %v1436 = vmul.f32 %v1404, 0.5
    %v1437 = vmul.f32 %v1405, 0.5
    %v1438 = vmul.f32 %v1406, 0.5
    %v1439 = vmul.f32 %v1407, 0.5
    %v1440 = vmul.f32 %v1408, 0.5
    %v1441 = vmul.f32 %v1409, 0.5
    %v1442 = vmul.f32 %v1410, 0.5
    %v1443 = vmul.f32 %v1411, 0.5
    %v1444 = vmul.f32 %v1412, 0.5
    %v1445 = vmul.f32 %v1413, 0.5
    %v1446 = vmul.f32 %v1414, 0.5
    %v1447 = vmul.f32 %v1415, 0.5
    %v1448 = vmul.f32 %v1416, 0.5
    %v1449 = vmul.f32 %v1417, 0.5
    %v1450 = vmul.f32 %v1418, 0.5
    %v1451 = vmul.f32 %v1419, 0.5
    %v1452 = vmul.f32 %v1420, 0.5
    %v1453 = vmul.f32 %v1421, 0.5
    %v1454 = vmul.f32 %v1422, 0.5
    %v1455 = vmul.f32 %v1423, 0.5
    %v1456 = vmul.f32 %v1424, 0.5
    %v1457 = vmul.f32 %v1425, 0.5
    %v1458 = vmul.f32 %v1426, 0.5
    %v1459 = vmul.f32 %v1427, 0.5
    %1460 = vst [vmem:[#allocation8] sm:$0xff] %v1428
    %1461 = vst [vmem:[#allocation8 + $0x8] sm:$0xff] %v1429
    %1462 = vst [vmem:[#allocation8 + $0x10] sm:$0xff] %v1430
    %1463 = vst [vmem:[#allocation8 + $0x18] sm:$0xff] %v1431
    %1464 = vst [vmem:[#allocation8 + $0x20] sm:$0xff] %v1432
    %1465 = vst [vmem:[#allocation8 + $0x28] sm:$0xff] %v1433
    %1466 = vst [vmem:[#allocation8 + $0x30] sm:$0xff] %v1434
    %1467 = vst [vmem:[#allocation8 + $0x38] sm:$0xff] %v1435
    %1468 = vst [vmem:[#allocation8 + $0x40] sm:$0xff] %v1436
    %1469 = vst [vmem:[#allocation8 + $0x48] sm:$0xff] %v1437
    %1470 = vst [vmem:[#allocation8 + $0x50] sm:$0xff] %v1438
    %1471 = vst [vmem:[#allocation8 + $0x58] sm:$0xff] %v1439
    %1472 = vst [vmem:[#allocation8 + $0x60] sm:$0xff] %v1440
    %1473 = vst [vmem:[#allocation8 + $0x68] sm:$0xff] %v1441
    %1474 = vst [vmem:[#allocation8 + $0x70] sm:$0xff] %v1442
    %1475 = vst [vmem:[#allocation8 + $0x78] sm:$0xff] %v1443
    %1476 = vst [vmem:[#allocation8 + $0x80] sm:$0xff] %v1444
    %1477 = vst [vmem:[#allocation8 + $0x88] sm:$0xff] %v1445
    %1478 = vst [vmem:[#allocation8 + $0x90] sm:$0xff] %v1446
    %1479 = vst [vmem:[#allocation8 + $0x98] sm:$0xff] %v1447
    %1480 = vst [vmem:[#allocation8 + $0xa0] sm:$0xff] %v1448
    %1481 = vst [vmem:[#allocation8 + $0xa8] sm:$0xff] %v1449
    %1482 = vst [vmem:[#allocation8 + $0xb0] sm:$0xff] %v1450
    %1483 = vst [vmem:[#allocation8 + $0xb8] sm:$0xff] %v1451
    %1484 = vst [vmem:[#allocation8 + $0xc0] sm:$0xff] %v1452
    %1485 = vst [vmem:[#allocation8 + $0xc8] sm:$0xff] %v1453
    %1486 = vst [vmem:[#allocation8 + $0xd0] sm:$0xff] %v1454
    %1487 = vst [vmem:[#allocation8 + $0xd8] sm:$0xff] %v1455
    %1488 = vst [vmem:[#allocation8 + $0xe0] sm:$0xff] %v1456
    %1489 = vst [vmem:[#allocation8 + $0xe8] sm:$0xff] %v1457
    %1490 = vst [vmem:[#allocation8 + $0xf0] sm:$0xff] %v1458
    %1491 = vst [vmem:[#allocation8 + $0xf8] sm:$0xff] %v1459
    // Predicated region
    $region26: #{autoencoder_forward.1} parent=1 // pred_check
      _
    $region27: #{autoencoder_forward.1} parent=1 // pred_check_branch
      %1493 = sbr.rel (0) target = $region29
    $region28: #{autoencoder_forward.1} parent=1 // pred_region
      %1495 = vsyncadd [#allocation4], 0
      %s1496 = sshll.u32 [#allocation8], 4
      %s1497 = int_to_ptr.vmem [resolvable:$true] %s1496
      %s1498 = sshll.u32 %s3, 4
      %s1499 = int_to_ptr.hbm [resolvable:$true] %s1498
      %1504 = dma.vmem_to_hbm [thread:$0]  %s1497, 4096, %s1499, [#allocation4], 128, 128, 8
    $region29: #{autoencoder_forward.1} parent=1 // pred_fallthru
      _
    // Predicated region
    $region30: #{autoencoder_forward.1} parent=1 // pred_check
      _
    $region31: #{autoencoder_forward.1} parent=1 // pred_check_branch
      %1506 = sbr.rel (0) target = $region33
    $region32: #{autoencoder_forward.1} parent=1 // pred_region
      %1508 = dma.done [#allocation4], 4096
    $region33: #{autoencoder_forward.1} parent=1 // pred_fallthru
      _
    %1509 = vsyncpa [#allocation3], 1
    %1510 = vsyncpa [#allocation6], 1
    %1511 = vsyncpa [#allocation4], 1

</llo_original>
